<compile_context>
chip_gen: v7x
topology: tpu7x:2x2x1
jax: 0.10.0
libtpu: 0.0.40
codegen_flags: <defaults>
</compile_context>

<pallas_src>
import jax
import jax.numpy as jnp
from jax.experimental import pallas as pl
from jax.experimental.pallas import tpu as pltpu

_LANE = 128
_SUBLANE = 8


def _round_up(a, b):
    return (a + b - 1) // b * b


def _mlp_kernel(x_ref, w1_ref, b1_ref, w2_ref, b2_ref, w3_ref, b3_ref, o_ref):
    # x_ref: VMEM [n_in, TBR, 128] (batch on sublanes+lanes, one slab per feature)
    # w*_ref/b*_ref: SMEM, PyTorch layout [out, in] / [out]
    n_in = x_ref.shape[0]
    n_h1 = w1_ref.shape[0]   # 10
    n_h2 = w2_ref.shape[0]   # 8

    # Per-feature lane-dense slabs [TBR, 128], f32.
    x_slabs = [x_ref[i].astype(jnp.float32) for i in range(n_in)]

    def dense(slabs, w_ref, b_ref, n_out, apply_sigmoid):
        # out[j] = act( sum_i w[j, i] * slabs[i] + b[j] )  -- VPU broadcast FMA,
        # fully unrolled (n_out, n_in are tiny compile-time constants).
        outs = []
        for j in range(n_out):
            acc = slabs[0] * w_ref[j, 0]
            for i in range(1, len(slabs)):
                acc = acc + slabs[i] * w_ref[j, i]
            acc = acc + b_ref[j]
            outs.append(jax.nn.sigmoid(acc) if apply_sigmoid else acc)
        return outs

    h1 = dense(x_slabs, w1_ref, b1_ref, n_h1, True)
    h2 = dense(h1, w2_ref, b2_ref, n_h2, True)
    out = dense(h2, w3_ref, b3_ref, 1, False)[0]   # [TBR, 128]
    o_ref[...] = out.astype(o_ref.dtype)


def boxflownet_mlp(x, params, *, block_rows=512):
    """x: [B, n_inputs] float32.  params: dict of w1,b1,w2,b2,w3,b3 in
    PyTorch layout (w: [out, in], b: [out])."""
    B, n_in = x.shape
    w1, b1 = params["w1"], params["b1"]   # (10, n_in), (10,)
    w2, b2 = params["w2"], params["b2"]   # (8, 10),    (8,)
    w3, b3 = params["w3"], params["b3"]   # (1, 8),     (1,)

    # Batch -> (rows, 128) lanes; pad batch so it tiles evenly.
    rows_total = max(1, pl.cdiv(B, _LANE))
    tbr = min(_round_up(block_rows, _SUBLANE), _round_up(rows_total, _SUBLANE))
    rows_padded = _round_up(rows_total, tbr)
    Bp = rows_padded * _LANE

    if Bp == B:
        xp = x
    else:
        xp = jnp.zeros((Bp, n_in), x.dtype).at[:B].set(x)

    # Batch on lanes: (n_in, rows, 128); batch index b -> (b // 128, b % 128).
    x_lanes = xp.T.reshape(n_in, rows_padded, _LANE)

    grid = (rows_padded // tbr,)
    smem_spec = pl.BlockSpec(memory_space=pltpu.MemorySpace.SMEM)

    out = pl.pallas_call(
        _mlp_kernel,
        out_shape=jax.ShapeDtypeStruct((rows_padded, _LANE), x.dtype),
        grid_spec=pltpu.PrefetchScalarGridSpec(
            num_scalar_prefetch=0,
            grid=grid,
            in_specs=[
                pl.BlockSpec((n_in, tbr, _LANE), lambda i: (0, i, 0)),  # x slabs
                smem_spec, smem_spec,   # w1, b1
                smem_spec, smem_spec,   # w2, b2
                smem_spec, smem_spec,   # w3, b3
            ],
            out_specs=pl.BlockSpec((tbr, _LANE), lambda i: (i, 0)),
        ),
        compiler_params=pltpu.CompilerParams(
            dimension_semantics=("parallel",)),   # megacore sharding on v7x
    )(x_lanes, w1, b1, w2, b2, w3, b3)

    # Lane-dense slab -> (B, 1); drop padded rows.
    return out.reshape(Bp, 1)[:B]


def init_params(key, n_inputs):
    """Mimics the PyTorch module: weights xavier_uniform_ (stored [out, in]),
    biases default U(-1/sqrt(fan_in), 1/sqrt(fan_in))."""
    ks = jax.random.split(key, 6)

    def xavier(k, fan_in, fan_out):
        a = jnp.sqrt(6.0 / (fan_in + fan_out))
        return jax.random.uniform(k, (fan_out, fan_in), jnp.float32, -a, a)

    def bias(k, fan_in, fan_out):
        b = 1.0 / jnp.sqrt(fan_in)
        return jax.random.uniform(k, (fan_out,), jnp.float32, -b, b)

    return {
        "w1": xavier(ks[0], n_inputs, 10), "b1": bias(ks[1], n_inputs, 10),
        "w2": xavier(ks[2], 10, 8),        "b2": bias(ks[3], 10, 8),
        "w3": xavier(ks[4], 8, 1),         "b3": bias(ks[5], 8, 1),
    }


def _reference(x, p):
    h1 = jax.nn.sigmoid(x @ p["w1"].T + p["b1"])
    h2 = jax.nn.sigmoid(h1 @ p["w2"].T + p["b2"])
    return h2 @ p["w3"].T + p["b3"]


if __name__ == "__main__":
    key = jax.random.PRNGKey(0)
    k_x, k_p = jax.random.split(key)

    n_inputs = 3     # e.g. (x, y, t) coordinates for the cavity-flow PINN
    batch = 300      # deliberately not a multiple of 128 to exercise padding

    x = jax.random.normal(k_x, (batch, n_inputs), jnp.float32)
    params = init_params(k_p, n_inputs)

    out = boxflownet_mlp(x, params)
    out = jax.block_until_ready(out)

    ref = _reference(x, params)
    assert out.shape == (batch, 1)
    assert jnp.allclose(out, ref, atol=1e-5, rtol=1e-5), "mismatch vs reference"

    print("KERNEL_OK")
</pallas_src>

<mosaic_0001>
module attributes {stable_mosaic.version = 11 : i64} {
  func.func @_mlp_kernel(%arg0: i32, %arg1: memref<3x8x128xf32, #tpu.memory_space<vmem>>, %arg2: memref<10x3xf32, #tpu.memory_space<smem>>, %arg3: memref<10xf32, #tpu.memory_space<smem>>, %arg4: memref<8x10xf32, #tpu.memory_space<smem>>, %arg5: memref<8xf32, #tpu.memory_space<smem>>, %arg6: memref<1x8xf32, #tpu.memory_space<smem>>, %arg7: memref<1xf32, #tpu.memory_space<smem>>, %arg8: memref<8x128xf32, #tpu.memory_space<vmem>>) attributes {dimension_semantics = [#tpu.dimension_semantics<parallel>], iteration_bounds = array<i64: 1>, scalar_prefetch = 0 : i64, scratch_operands = 0 : i64, tpu.core_type = #tpu.core_type<tc>, window_params = [{transform_indices = @transform_0, window_bounds = array<i64: 3, 8, 128>}, {transform_indices = @transform_1, window_bounds = array<i64: 10, 3>}, {transform_indices = @transform_2, window_bounds = array<i64: 10>}, {transform_indices = @transform_3, window_bounds = array<i64: 8, 10>}, {transform_indices = @transform_4, window_bounds = array<i64: 8>}, {transform_indices = @transform_5, window_bounds = array<i64: 1, 8>}, {transform_indices = @transform_6, window_bounds = array<i64: 1>}, {transform_indices = @transform_7, window_bounds = array<i64: 8, 128>}]} {
    %c0 = arith.constant 0 : index
    %c0_0 = arith.constant 0 : index
    %c0_1 = arith.constant 0 : index
    %0 = vector.load %arg1[%c0, %c0_0, %c0_1] : memref<3x8x128xf32, #tpu.memory_space<vmem>>, vector<1x8x128xf32>
    %1 = vector.shape_cast %0 : vector<1x8x128xf32> to vector<8x128xf32>
    %c1 = arith.constant 1 : index
    %c0_2 = arith.constant 0 : index
    %c0_3 = arith.constant 0 : index
    %2 = vector.load %arg1[%c1, %c0_2, %c0_3] : memref<3x8x128xf32, #tpu.memory_space<vmem>>, vector<1x8x128xf32>
    %3 = vector.shape_cast %2 : vector<1x8x128xf32> to vector<8x128xf32>
    %c2 = arith.constant 2 : index
    %c0_4 = arith.constant 0 : index
    %c0_5 = arith.constant 0 : index
    %4 = vector.load %arg1[%c2, %c0_4, %c0_5] : memref<3x8x128xf32, #tpu.memory_space<vmem>>, vector<1x8x128xf32>
    %5 = vector.shape_cast %4 : vector<1x8x128xf32> to vector<8x128xf32>
    %c0_6 = arith.constant 0 : index
    %c0_7 = arith.constant 0 : index
    %6 = memref.load %arg2[%c0_6, %c0_7] : memref<10x3xf32, #tpu.memory_space<smem>>
    %7 = vector.broadcast %6 : f32 to vector<8x128xf32>
    %8 = arith.mulf %1, %7 : vector<8x128xf32>
    %c0_8 = arith.constant 0 : index
    %c1_9 = arith.constant 1 : index
    %9 = memref.load %arg2[%c0_8, %c1_9] : memref<10x3xf32, #tpu.memory_space<smem>>
    %10 = vector.broadcast %9 : f32 to vector<8x128xf32>
    %11 = arith.mulf %3, %10 : vector<8x128xf32>
    %12 = arith.addf %8, %11 : vector<8x128xf32>
    %c0_10 = arith.constant 0 : index
    %c2_11 = arith.constant 2 : index
    %13 = memref.load %arg2[%c0_10, %c2_11] : memref<10x3xf32, #tpu.memory_space<smem>>
    %14 = vector.broadcast %13 : f32 to vector<8x128xf32>
    %15 = arith.mulf %5, %14 : vector<8x128xf32>
    %16 = arith.addf %12, %15 : vector<8x128xf32>
    %c0_12 = arith.constant 0 : index
    %17 = memref.load %arg3[%c0_12] : memref<10xf32, #tpu.memory_space<smem>>
    %18 = vector.broadcast %17 : f32 to vector<8x128xf32>
    %19 = arith.addf %16, %18 : vector<8x128xf32>
    %20 = arith.negf %19 : vector<8x128xf32>
    %21 = math.exp %20 : vector<8x128xf32>
    %cst = arith.constant 1.000000e+00 : f32
    %22 = vector.broadcast %cst : f32 to vector<8x128xf32>
    %23 = arith.addf %22, %21 : vector<8x128xf32>
    %24 = arith.divf %22, %23 : vector<8x128xf32>
    %c1_13 = arith.constant 1 : index
    %c0_14 = arith.constant 0 : index
    %25 = memref.load %arg2[%c1_13, %c0_14] : memref<10x3xf32, #tpu.memory_space<smem>>
    %26 = vector.broadcast %25 : f32 to vector<8x128xf32>
    %27 = arith.mulf %1, %26 : vector<8x128xf32>
    %c1_15 = arith.constant 1 : index
    %c1_16 = arith.constant 1 : index
    %28 = memref.load %arg2[%c1_15, %c1_16] : memref<10x3xf32, #tpu.memory_space<smem>>
    %29 = vector.broadcast %28 : f32 to vector<8x128xf32>
    %30 = arith.mulf %3, %29 : vector<8x128xf32>
    %31 = arith.addf %27, %30 : vector<8x128xf32>
    %c1_17 = arith.constant 1 : index
    %c2_18 = arith.constant 2 : index
    %32 = memref.load %arg2[%c1_17, %c2_18] : memref<10x3xf32, #tpu.memory_space<smem>>
    %33 = vector.broadcast %32 : f32 to vector<8x128xf32>
    %34 = arith.mulf %5, %33 : vector<8x128xf32>
    %35 = arith.addf %31, %34 : vector<8x128xf32>
    %c1_19 = arith.constant 1 : index
    %36 = memref.load %arg3[%c1_19] : memref<10xf32, #tpu.memory_space<smem>>
    %37 = vector.broadcast %36 : f32 to vector<8x128xf32>
    %38 = arith.addf %35, %37 : vector<8x128xf32>
    %39 = arith.negf %38 : vector<8x128xf32>
    %40 = math.exp %39 : vector<8x128xf32>
    %cst_20 = arith.constant 1.000000e+00 : f32
    %41 = vector.broadcast %cst_20 : f32 to vector<8x128xf32>
    %42 = arith.addf %41, %40 : vector<8x128xf32>
    %43 = arith.divf %41, %42 : vector<8x128xf32>
    %c2_21 = arith.constant 2 : index
    %c0_22 = arith.constant 0 : index
    %44 = memref.load %arg2[%c2_21, %c0_22] : memref<10x3xf32, #tpu.memory_space<smem>>
    %45 = vector.broadcast %44 : f32 to vector<8x128xf32>
    %46 = arith.mulf %1, %45 : vector<8x128xf32>
    %c2_23 = arith.constant 2 : index
    %c1_24 = arith.constant 1 : index
    %47 = memref.load %arg2[%c2_23, %c1_24] : memref<10x3xf32, #tpu.memory_space<smem>>
    %48 = vector.broadcast %47 : f32 to vector<8x128xf32>
    %49 = arith.mulf %3, %48 : vector<8x128xf32>
    %50 = arith.addf %46, %49 : vector<8x128xf32>
    %c2_25 = arith.constant 2 : index
    %c2_26 = arith.constant 2 : index
    %51 = memref.load %arg2[%c2_25, %c2_26] : memref<10x3xf32, #tpu.memory_space<smem>>
    %52 = vector.broadcast %51 : f32 to vector<8x128xf32>
    %53 = arith.mulf %5, %52 : vector<8x128xf32>
    %54 = arith.addf %50, %53 : vector<8x128xf32>
    %c2_27 = arith.constant 2 : index
    %55 = memref.load %arg3[%c2_27] : memref<10xf32, #tpu.memory_space<smem>>
    %56 = vector.broadcast %55 : f32 to vector<8x128xf32>
    %57 = arith.addf %54, %56 : vector<8x128xf32>
    %58 = arith.negf %57 : vector<8x128xf32>
    %59 = math.exp %58 : vector<8x128xf32>
    %cst_28 = arith.constant 1.000000e+00 : f32
    %60 = vector.broadcast %cst_28 : f32 to vector<8x128xf32>
    %61 = arith.addf %60, %59 : vector<8x128xf32>
    %62 = arith.divf %60, %61 : vector<8x128xf32>
    %c3 = arith.constant 3 : index
    %c0_29 = arith.constant 0 : index
    %63 = memref.load %arg2[%c3, %c0_29] : memref<10x3xf32, #tpu.memory_space<smem>>
    %64 = vector.broadcast %63 : f32 to vector<8x128xf32>
    %65 = arith.mulf %1, %64 : vector<8x128xf32>
    %c3_30 = arith.constant 3 : index
    %c1_31 = arith.constant 1 : index
    %66 = memref.load %arg2[%c3_30, %c1_31] : memref<10x3xf32, #tpu.memory_space<smem>>
    %67 = vector.broadcast %66 : f32 to vector<8x128xf32>
    %68 = arith.mulf %3, %67 : vector<8x128xf32>
    %69 = arith.addf %65, %68 : vector<8x128xf32>
    %c3_32 = arith.constant 3 : index
    %c2_33 = arith.constant 2 : index
    %70 = memref.load %arg2[%c3_32, %c2_33] : memref<10x3xf32, #tpu.memory_space<smem>>
    %71 = vector.broadcast %70 : f32 to vector<8x128xf32>
    %72 = arith.mulf %5, %71 : vector<8x128xf32>
    %73 = arith.addf %69, %72 : vector<8x128xf32>
    %c3_34 = arith.constant 3 : index
    %74 = memref.load %arg3[%c3_34] : memref<10xf32, #tpu.memory_space<smem>>
    %75 = vector.broadcast %74 : f32 to vector<8x128xf32>
    %76 = arith.addf %73, %75 : vector<8x128xf32>
    %77 = arith.negf %76 : vector<8x128xf32>
    %78 = math.exp %77 : vector<8x128xf32>
    %cst_35 = arith.constant 1.000000e+00 : f32
    %79 = vector.broadcast %cst_35 : f32 to vector<8x128xf32>
    %80 = arith.addf %79, %78 : vector<8x128xf32>
    %81 = arith.divf %79, %80 : vector<8x128xf32>
    %c4 = arith.constant 4 : index
    %c0_36 = arith.constant 0 : index
    %82 = memref.load %arg2[%c4, %c0_36] : memref<10x3xf32, #tpu.memory_space<smem>>
    %83 = vector.broadcast %82 : f32 to vector<8x128xf32>
    %84 = arith.mulf %1, %83 : vector<8x128xf32>
    %c4_37 = arith.constant 4 : index
    %c1_38 = arith.constant 1 : index
    %85 = memref.load %arg2[%c4_37, %c1_38] : memref<10x3xf32, #tpu.memory_space<smem>>
    %86 = vector.broadcast %85 : f32 to vector<8x128xf32>
    %87 = arith.mulf %3, %86 : vector<8x128xf32>
    %88 = arith.addf %84, %87 : vector<8x128xf32>
    %c4_39 = arith.constant 4 : index
    %c2_40 = arith.constant 2 : index
    %89 = memref.load %arg2[%c4_39, %c2_40] : memref<10x3xf32, #tpu.memory_space<smem>>
    %90 = vector.broadcast %89 : f32 to vector<8x128xf32>
    %91 = arith.mulf %5, %90 : vector<8x128xf32>
    %92 = arith.addf %88, %91 : vector<8x128xf32>
    %c4_41 = arith.constant 4 : index
    %93 = memref.load %arg3[%c4_41] : memref<10xf32, #tpu.memory_space<smem>>
    %94 = vector.broadcast %93 : f32 to vector<8x128xf32>
    %95 = arith.addf %92, %94 : vector<8x128xf32>
    %96 = arith.negf %95 : vector<8x128xf32>
    %97 = math.exp %96 : vector<8x128xf32>
    %cst_42 = arith.constant 1.000000e+00 : f32
    %98 = vector.broadcast %cst_42 : f32 to vector<8x128xf32>
    %99 = arith.addf %98, %97 : vector<8x128xf32>
    %100 = arith.divf %98, %99 : vector<8x128xf32>
    %c5 = arith.constant 5 : index
    %c0_43 = arith.constant 0 : index
    %101 = memref.load %arg2[%c5, %c0_43] : memref<10x3xf32, #tpu.memory_space<smem>>
    %102 = vector.broadcast %101 : f32 to vector<8x128xf32>
    %103 = arith.mulf %1, %102 : vector<8x128xf32>
    %c5_44 = arith.constant 5 : index
    %c1_45 = arith.constant 1 : index
    %104 = memref.load %arg2[%c5_44, %c1_45] : memref<10x3xf32, #tpu.memory_space<smem>>
    %105 = vector.broadcast %104 : f32 to vector<8x128xf32>
    %106 = arith.mulf %3, %105 : vector<8x128xf32>
    %107 = arith.addf %103, %106 : vector<8x128xf32>
    %c5_46 = arith.constant 5 : index
    %c2_47 = arith.constant 2 : index
    %108 = memref.load %arg2[%c5_46, %c2_47] : memref<10x3xf32, #tpu.memory_space<smem>>
    %109 = vector.broadcast %108 : f32 to vector<8x128xf32>
    %110 = arith.mulf %5, %109 : vector<8x128xf32>
    %111 = arith.addf %107, %110 : vector<8x128xf32>
    %c5_48 = arith.constant 5 : index
    %112 = memref.load %arg3[%c5_48] : memref<10xf32, #tpu.memory_space<smem>>
    %113 = vector.broadcast %112 : f32 to vector<8x128xf32>
    %114 = arith.addf %111, %113 : vector<8x128xf32>
    %115 = arith.negf %114 : vector<8x128xf32>
    %116 = math.exp %115 : vector<8x128xf32>
    %cst_49 = arith.constant 1.000000e+00 : f32
    %117 = vector.broadcast %cst_49 : f32 to vector<8x128xf32>
    %118 = arith.addf %117, %116 : vector<8x128xf32>
    %119 = arith.divf %117, %118 : vector<8x128xf32>
    %c6 = arith.constant 6 : index
    %c0_50 = arith.constant 0 : index
    %120 = memref.load %arg2[%c6, %c0_50] : memref<10x3xf32, #tpu.memory_space<smem>>
    %121 = vector.broadcast %120 : f32 to vector<8x128xf32>
    %122 = arith.mulf %1, %121 : vector<8x128xf32>
    %c6_51 = arith.constant 6 : index
    %c1_52 = arith.constant 1 : index
    %123 = memref.load %arg2[%c6_51, %c1_52] : memref<10x3xf32, #tpu.memory_space<smem>>
    %124 = vector.broadcast %123 : f32 to vector<8x128xf32>
    %125 = arith.mulf %3, %124 : vector<8x128xf32>
    %126 = arith.addf %122, %125 : vector<8x128xf32>
    %c6_53 = arith.constant 6 : index
    %c2_54 = arith.constant 2 : index
    %127 = memref.load %arg2[%c6_53, %c2_54] : memref<10x3xf32, #tpu.memory_space<smem>>
    %128 = vector.broadcast %127 : f32 to vector<8x128xf32>
    %129 = arith.mulf %5, %128 : vector<8x128xf32>
    %130 = arith.addf %126, %129 : vector<8x128xf32>
    %c6_55 = arith.constant 6 : index
    %131 = memref.load %arg3[%c6_55] : memref<10xf32, #tpu.memory_space<smem>>
    %132 = vector.broadcast %131 : f32 to vector<8x128xf32>
    %133 = arith.addf %130, %132 : vector<8x128xf32>
    %134 = arith.negf %133 : vector<8x128xf32>
    %135 = math.exp %134 : vector<8x128xf32>
    %cst_56 = arith.constant 1.000000e+00 : f32
    %136 = vector.broadcast %cst_56 : f32 to vector<8x128xf32>
    %137 = arith.addf %136, %135 : vector<8x128xf32>
    %138 = arith.divf %136, %137 : vector<8x128xf32>
    %c7 = arith.constant 7 : index
    %c0_57 = arith.constant 0 : index
    %139 = memref.load %arg2[%c7, %c0_57] : memref<10x3xf32, #tpu.memory_space<smem>>
    %140 = vector.broadcast %139 : f32 to vector<8x128xf32>
    %141 = arith.mulf %1, %140 : vector<8x128xf32>
    %c7_58 = arith.constant 7 : index
    %c1_59 = arith.constant 1 : index
    %142 = memref.load %arg2[%c7_58, %c1_59] : memref<10x3xf32, #tpu.memory_space<smem>>
    %143 = vector.broadcast %142 : f32 to vector<8x128xf32>
    %144 = arith.mulf %3, %143 : vector<8x128xf32>
    %145 = arith.addf %141, %144 : vector<8x128xf32>
    %c7_60 = arith.constant 7 : index
    %c2_61 = arith.constant 2 : index
    %146 = memref.load %arg2[%c7_60, %c2_61] : memref<10x3xf32, #tpu.memory_space<smem>>
    %147 = vector.broadcast %146 : f32 to vector<8x128xf32>
    %148 = arith.mulf %5, %147 : vector<8x128xf32>
    %149 = arith.addf %145, %148 : vector<8x128xf32>
    %c7_62 = arith.constant 7 : index
    %150 = memref.load %arg3[%c7_62] : memref<10xf32, #tpu.memory_space<smem>>
    %151 = vector.broadcast %150 : f32 to vector<8x128xf32>
    %152 = arith.addf %149, %151 : vector<8x128xf32>
    %153 = arith.negf %152 : vector<8x128xf32>
    %154 = math.exp %153 : vector<8x128xf32>
    %cst_63 = arith.constant 1.000000e+00 : f32
    %155 = vector.broadcast %cst_63 : f32 to vector<8x128xf32>
    %156 = arith.addf %155, %154 : vector<8x128xf32>
    %157 = arith.divf %155, %156 : vector<8x128xf32>
    %c8 = arith.constant 8 : index
    %c0_64 = arith.constant 0 : index
    %158 = memref.load %arg2[%c8, %c0_64] : memref<10x3xf32, #tpu.memory_space<smem>>
    %159 = vector.broadcast %158 : f32 to vector<8x128xf32>
    %160 = arith.mulf %1, %159 : vector<8x128xf32>
    %c8_65 = arith.constant 8 : index
    %c1_66 = arith.constant 1 : index
    %161 = memref.load %arg2[%c8_65, %c1_66] : memref<10x3xf32, #tpu.memory_space<smem>>
    %162 = vector.broadcast %161 : f32 to vector<8x128xf32>
    %163 = arith.mulf %3, %162 : vector<8x128xf32>
    %164 = arith.addf %160, %163 : vector<8x128xf32>
    %c8_67 = arith.constant 8 : index
    %c2_68 = arith.constant 2 : index
    %165 = memref.load %arg2[%c8_67, %c2_68] : memref<10x3xf32, #tpu.memory_space<smem>>
    %166 = vector.broadcast %165 : f32 to vector<8x128xf32>
    %167 = arith.mulf %5, %166 : vector<8x128xf32>
    %168 = arith.addf %164, %167 : vector<8x128xf32>
    %c8_69 = arith.constant 8 : index
    %169 = memref.load %arg3[%c8_69] : memref<10xf32, #tpu.memory_space<smem>>
    %170 = vector.broadcast %169 : f32 to vector<8x128xf32>
    %171 = arith.addf %168, %170 : vector<8x128xf32>
    %172 = arith.negf %171 : vector<8x128xf32>
    %173 = math.exp %172 : vector<8x128xf32>
    %cst_70 = arith.constant 1.000000e+00 : f32
    %174 = vector.broadcast %cst_70 : f32 to vector<8x128xf32>
    %175 = arith.addf %174, %173 : vector<8x128xf32>
    %176 = arith.divf %174, %175 : vector<8x128xf32>
    %c9 = arith.constant 9 : index
    %c0_71 = arith.constant 0 : index
    %177 = memref.load %arg2[%c9, %c0_71] : memref<10x3xf32, #tpu.memory_space<smem>>
    %178 = vector.broadcast %177 : f32 to vector<8x128xf32>
    %179 = arith.mulf %1, %178 : vector<8x128xf32>
    %c9_72 = arith.constant 9 : index
    %c1_73 = arith.constant 1 : index
    %180 = memref.load %arg2[%c9_72, %c1_73] : memref<10x3xf32, #tpu.memory_space<smem>>
    %181 = vector.broadcast %180 : f32 to vector<8x128xf32>
    %182 = arith.mulf %3, %181 : vector<8x128xf32>
    %183 = arith.addf %179, %182 : vector<8x128xf32>
    %c9_74 = arith.constant 9 : index
    %c2_75 = arith.constant 2 : index
    %184 = memref.load %arg2[%c9_74, %c2_75] : memref<10x3xf32, #tpu.memory_space<smem>>
    %185 = vector.broadcast %184 : f32 to vector<8x128xf32>
    %186 = arith.mulf %5, %185 : vector<8x128xf32>
    %187 = arith.addf %183, %186 : vector<8x128xf32>
    %c9_76 = arith.constant 9 : index
    %188 = memref.load %arg3[%c9_76] : memref<10xf32, #tpu.memory_space<smem>>
    %189 = vector.broadcast %188 : f32 to vector<8x128xf32>
    %190 = arith.addf %187, %189 : vector<8x128xf32>
    %191 = arith.negf %190 : vector<8x128xf32>
    %192 = math.exp %191 : vector<8x128xf32>
    %cst_77 = arith.constant 1.000000e+00 : f32
    %193 = vector.broadcast %cst_77 : f32 to vector<8x128xf32>
    %194 = arith.addf %193, %192 : vector<8x128xf32>
    %195 = arith.divf %193, %194 : vector<8x128xf32>
    %c0_78 = arith.constant 0 : index
    %c0_79 = arith.constant 0 : index
    %196 = memref.load %arg4[%c0_78, %c0_79] : memref<8x10xf32, #tpu.memory_space<smem>>
    %197 = vector.broadcast %196 : f32 to vector<8x128xf32>
    %198 = arith.mulf %24, %197 : vector<8x128xf32>
    %c0_80 = arith.constant 0 : index
    %c1_81 = arith.constant 1 : index
    %199 = memref.load %arg4[%c0_80, %c1_81] : memref<8x10xf32, #tpu.memory_space<smem>>
    %200 = vector.broadcast %199 : f32 to vector<8x128xf32>
    %201 = arith.mulf %43, %200 : vector<8x128xf32>
    %202 = arith.addf %198, %201 : vector<8x128xf32>
    %c0_82 = arith.constant 0 : index
    %c2_83 = arith.constant 2 : index
    %203 = memref.load %arg4[%c0_82, %c2_83] : memref<8x10xf32, #tpu.memory_space<smem>>
    %204 = vector.broadcast %203 : f32 to vector<8x128xf32>
    %205 = arith.mulf %62, %204 : vector<8x128xf32>
    %206 = arith.addf %202, %205 : vector<8x128xf32>
    %c0_84 = arith.constant 0 : index
    %c3_85 = arith.constant 3 : index
    %207 = memref.load %arg4[%c0_84, %c3_85] : memref<8x10xf32, #tpu.memory_space<smem>>
    %208 = vector.broadcast %207 : f32 to vector<8x128xf32>
    %209 = arith.mulf %81, %208 : vector<8x128xf32>
    %210 = arith.addf %206, %209 : vector<8x128xf32>
    %c0_86 = arith.constant 0 : index
    %c4_87 = arith.constant 4 : index
    %211 = memref.load %arg4[%c0_86, %c4_87] : memref<8x10xf32, #tpu.memory_space<smem>>
    %212 = vector.broadcast %211 : f32 to vector<8x128xf32>
    %213 = arith.mulf %100, %212 : vector<8x128xf32>
    %214 = arith.addf %210, %213 : vector<8x128xf32>
    %c0_88 = arith.constant 0 : index
    %c5_89 = arith.constant 5 : index
    %215 = memref.load %arg4[%c0_88, %c5_89] : memref<8x10xf32, #tpu.memory_space<smem>>
    %216 = vector.broadcast %215 : f32 to vector<8x128xf32>
    %217 = arith.mulf %119, %216 : vector<8x128xf32>
    %218 = arith.addf %214, %217 : vector<8x128xf32>
    %c0_90 = arith.constant 0 : index
    %c6_91 = arith.constant 6 : index
    %219 = memref.load %arg4[%c0_90, %c6_91] : memref<8x10xf32, #tpu.memory_space<smem>>
    %220 = vector.broadcast %219 : f32 to vector<8x128xf32>
    %221 = arith.mulf %138, %220 : vector<8x128xf32>
    %222 = arith.addf %218, %221 : vector<8x128xf32>
    %c0_92 = arith.constant 0 : index
    %c7_93 = arith.constant 7 : index
    %223 = memref.load %arg4[%c0_92, %c7_93] : memref<8x10xf32, #tpu.memory_space<smem>>
    %224 = vector.broadcast %223 : f32 to vector<8x128xf32>
    %225 = arith.mulf %157, %224 : vector<8x128xf32>
    %226 = arith.addf %222, %225 : vector<8x128xf32>
    %c0_94 = arith.constant 0 : index
    %c8_95 = arith.constant 8 : index
    %227 = memref.load %arg4[%c0_94, %c8_95] : memref<8x10xf32, #tpu.memory_space<smem>>
    %228 = vector.broadcast %227 : f32 to vector<8x128xf32>
    %229 = arith.mulf %176, %228 : vector<8x128xf32>
    %230 = arith.addf %226, %229 : vector<8x128xf32>
    %c0_96 = arith.constant 0 : index
    %c9_97 = arith.constant 9 : index
    %231 = memref.load %arg4[%c0_96, %c9_97] : memref<8x10xf32, #tpu.memory_space<smem>>
    %232 = vector.broadcast %231 : f32 to vector<8x128xf32>
    %233 = arith.mulf %195, %232 : vector<8x128xf32>
    %234 = arith.addf %230, %233 : vector<8x128xf32>
    %c0_98 = arith.constant 0 : index
    %235 = memref.load %arg5[%c0_98] : memref<8xf32, #tpu.memory_space<smem>>
    %236 = vector.broadcast %235 : f32 to vector<8x128xf32>
    %237 = arith.addf %234, %236 : vector<8x128xf32>
    %238 = arith.negf %237 : vector<8x128xf32>
    %239 = math.exp %238 : vector<8x128xf32>
    %cst_99 = arith.constant 1.000000e+00 : f32
    %240 = vector.broadcast %cst_99 : f32 to vector<8x128xf32>
    %241 = arith.addf %240, %239 : vector<8x128xf32>
    %242 = arith.divf %240, %241 : vector<8x128xf32>
    %c1_100 = arith.constant 1 : index
    %c0_101 = arith.constant 0 : index
    %243 = memref.load %arg4[%c1_100, %c0_101] : memref<8x10xf32, #tpu.memory_space<smem>>
    %244 = vector.broadcast %243 : f32 to vector<8x128xf32>
    %245 = arith.mulf %24, %244 : vector<8x128xf32>
    %c1_102 = arith.constant 1 : index
    %c1_103 = arith.constant 1 : index
    %246 = memref.load %arg4[%c1_102, %c1_103] : memref<8x10xf32, #tpu.memory_space<smem>>
    %247 = vector.broadcast %246 : f32 to vector<8x128xf32>
    %248 = arith.mulf %43, %247 : vector<8x128xf32>
    %249 = arith.addf %245, %248 : vector<8x128xf32>
    %c1_104 = arith.constant 1 : index
    %c2_105 = arith.constant 2 : index
    %250 = memref.load %arg4[%c1_104, %c2_105] : memref<8x10xf32, #tpu.memory_space<smem>>
    %251 = vector.broadcast %250 : f32 to vector<8x128xf32>
    %252 = arith.mulf %62, %251 : vector<8x128xf32>
    %253 = arith.addf %249, %252 : vector<8x128xf32>
    %c1_106 = arith.constant 1 : index
    %c3_107 = arith.constant 3 : index
    %254 = memref.load %arg4[%c1_106, %c3_107] : memref<8x10xf32, #tpu.memory_space<smem>>
    %255 = vector.broadcast %254 : f32 to vector<8x128xf32>
    %256 = arith.mulf %81, %255 : vector<8x128xf32>
    %257 = arith.addf %253, %256 : vector<8x128xf32>
    %c1_108 = arith.constant 1 : index
    %c4_109 = arith.constant 4 : index
    %258 = memref.load %arg4[%c1_108, %c4_109] : memref<8x10xf32, #tpu.memory_space<smem>>
    %259 = vector.broadcast %258 : f32 to vector<8x128xf32>
    %260 = arith.mulf %100, %259 : vector<8x128xf32>
    %261 = arith.addf %257, %260 : vector<8x128xf32>
    %c1_110 = arith.constant 1 : index
    %c5_111 = arith.constant 5 : index
    %262 = memref.load %arg4[%c1_110, %c5_111] : memref<8x10xf32, #tpu.memory_space<smem>>
    %263 = vector.broadcast %262 : f32 to vector<8x128xf32>
    %264 = arith.mulf %119, %263 : vector<8x128xf32>
    %265 = arith.addf %261, %264 : vector<8x128xf32>
    %c1_112 = arith.constant 1 : index
    %c6_113 = arith.constant 6 : index
    %266 = memref.load %arg4[%c1_112, %c6_113] : memref<8x10xf32, #tpu.memory_space<smem>>
    %267 = vector.broadcast %266 : f32 to vector<8x128xf32>
    %268 = arith.mulf %138, %267 : vector<8x128xf32>
    %269 = arith.addf %265, %268 : vector<8x128xf32>
    %c1_114 = arith.constant 1 : index
    %c7_115 = arith.constant 7 : index
    %270 = memref.load %arg4[%c1_114, %c7_115] : memref<8x10xf32, #tpu.memory_space<smem>>
    %271 = vector.broadcast %270 : f32 to vector<8x128xf32>
    %272 = arith.mulf %157, %271 : vector<8x128xf32>
    %273 = arith.addf %269, %272 : vector<8x128xf32>
    %c1_116 = arith.constant 1 : index
    %c8_117 = arith.constant 8 : index
    %274 = memref.load %arg4[%c1_116, %c8_117] : memref<8x10xf32, #tpu.memory_space<smem>>
    %275 = vector.broadcast %274 : f32 to vector<8x128xf32>
    %276 = arith.mulf %176, %275 : vector<8x128xf32>
    %277 = arith.addf %273, %276 : vector<8x128xf32>
    %c1_118 = arith.constant 1 : index
    %c9_119 = arith.constant 9 : index
    %278 = memref.load %arg4[%c1_118, %c9_119] : memref<8x10xf32, #tpu.memory_space<smem>>
    %279 = vector.broadcast %278 : f32 to vector<8x128xf32>
    %280 = arith.mulf %195, %279 : vector<8x128xf32>
    %281 = arith.addf %277, %280 : vector<8x128xf32>
    %c1_120 = arith.constant 1 : index
    %282 = memref.load %arg5[%c1_120] : memref<8xf32, #tpu.memory_space<smem>>
    %283 = vector.broadcast %282 : f32 to vector<8x128xf32>
    %284 = arith.addf %281, %283 : vector<8x128xf32>
    %285 = arith.negf %284 : vector<8x128xf32>
    %286 = math.exp %285 : vector<8x128xf32>
    %cst_121 = arith.constant 1.000000e+00 : f32
    %287 = vector.broadcast %cst_121 : f32 to vector<8x128xf32>
    %288 = arith.addf %287, %286 : vector<8x128xf32>
    %289 = arith.divf %287, %288 : vector<8x128xf32>
    %c2_122 = arith.constant 2 : index
    %c0_123 = arith.constant 0 : index
    %290 = memref.load %arg4[%c2_122, %c0_123] : memref<8x10xf32, #tpu.memory_space<smem>>
    %291 = vector.broadcast %290 : f32 to vector<8x128xf32>
    %292 = arith.mulf %24, %291 : vector<8x128xf32>
    %c2_124 = arith.constant 2 : index
    %c1_125 = arith.constant 1 : index
    %293 = memref.load %arg4[%c2_124, %c1_125] : memref<8x10xf32, #tpu.memory_space<smem>>
    %294 = vector.broadcast %293 : f32 to vector<8x128xf32>
    %295 = arith.mulf %43, %294 : vector<8x128xf32>
    %296 = arith.addf %292, %295 : vector<8x128xf32>
    %c2_126 = arith.constant 2 : index
    %c2_127 = arith.constant 2 : index
    %297 = memref.load %arg4[%c2_126, %c2_127] : memref<8x10xf32, #tpu.memory_space<smem>>
    %298 = vector.broadcast %297 : f32 to vector<8x128xf32>
    %299 = arith.mulf %62, %298 : vector<8x128xf32>
    %300 = arith.addf %296, %299 : vector<8x128xf32>
    %c2_128 = arith.constant 2 : index
    %c3_129 = arith.constant 3 : index
    %301 = memref.load %arg4[%c2_128, %c3_129] : memref<8x10xf32, #tpu.memory_space<smem>>
    %302 = vector.broadcast %301 : f32 to vector<8x128xf32>
    %303 = arith.mulf %81, %302 : vector<8x128xf32>
    %304 = arith.addf %300, %303 : vector<8x128xf32>
    %c2_130 = arith.constant 2 : index
    %c4_131 = arith.constant 4 : index
    %305 = memref.load %arg4[%c2_130, %c4_131] : memref<8x10xf32, #tpu.memory_space<smem>>
    %306 = vector.broadcast %305 : f32 to vector<8x128xf32>
    %307 = arith.mulf %100, %306 : vector<8x128xf32>
    %308 = arith.addf %304, %307 : vector<8x128xf32>
    %c2_132 = arith.constant 2 : index
    %c5_133 = arith.constant 5 : index
    %309 = memref.load %arg4[%c2_132, %c5_133] : memref<8x10xf32, #tpu.memory_space<smem>>
    %310 = vector.broadcast %309 : f32 to vector<8x128xf32>
    %311 = arith.mulf %119, %310 : vector<8x128xf32>
    %312 = arith.addf %308, %311 : vector<8x128xf32>
    %c2_134 = arith.constant 2 : index
    %c6_135 = arith.constant 6 : index
    %313 = memref.load %arg4[%c2_134, %c6_135] : memref<8x10xf32, #tpu.memory_space<smem>>
    %314 = vector.broadcast %313 : f32 to vector<8x128xf32>
    %315 = arith.mulf %138, %314 : vector<8x128xf32>
    %316 = arith.addf %312, %315 : vector<8x128xf32>
    %c2_136 = arith.constant 2 : index
    %c7_137 = arith.constant 7 : index
    %317 = memref.load %arg4[%c2_136, %c7_137] : memref<8x10xf32, #tpu.memory_space<smem>>
    %318 = vector.broadcast %317 : f32 to vector<8x128xf32>
    %319 = arith.mulf %157, %318 : vector<8x128xf32>
    %320 = arith.addf %316, %319 : vector<8x128xf32>
    %c2_138 = arith.constant 2 : index
    %c8_139 = arith.constant 8 : index
    %321 = memref.load %arg4[%c2_138, %c8_139] : memref<8x10xf32, #tpu.memory_space<smem>>
    %322 = vector.broadcast %321 : f32 to vector<8x128xf32>
    %323 = arith.mulf %176, %322 : vector<8x128xf32>
    %324 = arith.addf %320, %323 : vector<8x128xf32>
    %c2_140 = arith.constant 2 : index
    %c9_141 = arith.constant 9 : index
    %325 = memref.load %arg4[%c2_140, %c9_141] : memref<8x10xf32, #tpu.memory_space<smem>>
    %326 = vector.broadcast %325 : f32 to vector<8x128xf32>
    %327 = arith.mulf %195, %326 : vector<8x128xf32>
    %328 = arith.addf %324, %327 : vector<8x128xf32>
    %c2_142 = arith.constant 2 : index
    %329 = memref.load %arg5[%c2_142] : memref<8xf32, #tpu.memory_space<smem>>
    %330 = vector.broadcast %329 : f32 to vector<8x128xf32>
    %331 = arith.addf %328, %330 : vector<8x128xf32>
    %332 = arith.negf %331 : vector<8x128xf32>
    %333 = math.exp %332 : vector<8x128xf32>
    %cst_143 = arith.constant 1.000000e+00 : f32
    %334 = vector.broadcast %cst_143 : f32 to vector<8x128xf32>
    %335 = arith.addf %334, %333 : vector<8x128xf32>
    %336 = arith.divf %334, %335 : vector<8x128xf32>
    %c3_144 = arith.constant 3 : index
    %c0_145 = arith.constant 0 : index
    %337 = memref.load %arg4[%c3_144, %c0_145] : memref<8x10xf32, #tpu.memory_space<smem>>
    %338 = vector.broadcast %337 : f32 to vector<8x128xf32>
    %339 = arith.mulf %24, %338 : vector<8x128xf32>
    %c3_146 = arith.constant 3 : index
    %c1_147 = arith.constant 1 : index
    %340 = memref.load %arg4[%c3_146, %c1_147] : memref<8x10xf32, #tpu.memory_space<smem>>
    %341 = vector.broadcast %340 : f32 to vector<8x128xf32>
    %342 = arith.mulf %43, %341 : vector<8x128xf32>
    %343 = arith.addf %339, %342 : vector<8x128xf32>
    %c3_148 = arith.constant 3 : index
    %c2_149 = arith.constant 2 : index
    %344 = memref.load %arg4[%c3_148, %c2_149] : memref<8x10xf32, #tpu.memory_space<smem>>
    %345 = vector.broadcast %344 : f32 to vector<8x128xf32>
    %346 = arith.mulf %62, %345 : vector<8x128xf32>
    %347 = arith.addf %343, %346 : vector<8x128xf32>
    %c3_150 = arith.constant 3 : index
    %c3_151 = arith.constant 3 : index
    %348 = memref.load %arg4[%c3_150, %c3_151] : memref<8x10xf32, #tpu.memory_space<smem>>
    %349 = vector.broadcast %348 : f32 to vector<8x128xf32>
    %350 = arith.mulf %81, %349 : vector<8x128xf32>
    %351 = arith.addf %347, %350 : vector<8x128xf32>
    %c3_152 = arith.constant 3 : index
    %c4_153 = arith.constant 4 : index
    %352 = memref.load %arg4[%c3_152, %c4_153] : memref<8x10xf32, #tpu.memory_space<smem>>
    %353 = vector.broadcast %352 : f32 to vector<8x128xf32>
    %354 = arith.mulf %100, %353 : vector<8x128xf32>
    %355 = arith.addf %351, %354 : vector<8x128xf32>
    %c3_154 = arith.constant 3 : index
    %c5_155 = arith.constant 5 : index
    %356 = memref.load %arg4[%c3_154, %c5_155] : memref<8x10xf32, #tpu.memory_space<smem>>
    %357 = vector.broadcast %356 : f32 to vector<8x128xf32>
    %358 = arith.mulf %119, %357 : vector<8x128xf32>
    %359 = arith.addf %355, %358 : vector<8x128xf32>
    %c3_156 = arith.constant 3 : index
    %c6_157 = arith.constant 6 : index
    %360 = memref.load %arg4[%c3_156, %c6_157] : memref<8x10xf32, #tpu.memory_space<smem>>
    %361 = vector.broadcast %360 : f32 to vector<8x128xf32>
    %362 = arith.mulf %138, %361 : vector<8x128xf32>
    %363 = arith.addf %359, %362 : vector<8x128xf32>
    %c3_158 = arith.constant 3 : index
    %c7_159 = arith.constant 7 : index
    %364 = memref.load %arg4[%c3_158, %c7_159] : memref<8x10xf32, #tpu.memory_space<smem>>
    %365 = vector.broadcast %364 : f32 to vector<8x128xf32>
    %366 = arith.mulf %157, %365 : vector<8x128xf32>
    %367 = arith.addf %363, %366 : vector<8x128xf32>
    %c3_160 = arith.constant 3 : index
    %c8_161 = arith.constant 8 : index
    %368 = memref.load %arg4[%c3_160, %c8_161] : memref<8x10xf32, #tpu.memory_space<smem>>
    %369 = vector.broadcast %368 : f32 to vector<8x128xf32>
    %370 = arith.mulf %176, %369 : vector<8x128xf32>
    %371 = arith.addf %367, %370 : vector<8x128xf32>
    %c3_162 = arith.constant 3 : index
    %c9_163 = arith.constant 9 : index
    %372 = memref.load %arg4[%c3_162, %c9_163] : memref<8x10xf32, #tpu.memory_space<smem>>
    %373 = vector.broadcast %372 : f32 to vector<8x128xf32>
    %374 = arith.mulf %195, %373 : vector<8x128xf32>
    %375 = arith.addf %371, %374 : vector<8x128xf32>
    %c3_164 = arith.constant 3 : index
    %376 = memref.load %arg5[%c3_164] : memref<8xf32, #tpu.memory_space<smem>>
    %377 = vector.broadcast %376 : f32 to vector<8x128xf32>
    %378 = arith.addf %375, %377 : vector<8x128xf32>
    %379 = arith.negf %378 : vector<8x128xf32>
    %380 = math.exp %379 : vector<8x128xf32>
    %cst_165 = arith.constant 1.000000e+00 : f32
    %381 = vector.broadcast %cst_165 : f32 to vector<8x128xf32>
    %382 = arith.addf %381, %380 : vector<8x128xf32>
    %383 = arith.divf %381, %382 : vector<8x128xf32>
    %c4_166 = arith.constant 4 : index
    %c0_167 = arith.constant 0 : index
    %384 = memref.load %arg4[%c4_166, %c0_167] : memref<8x10xf32, #tpu.memory_space<smem>>
    %385 = vector.broadcast %384 : f32 to vector<8x128xf32>
    %386 = arith.mulf %24, %385 : vector<8x128xf32>
    %c4_168 = arith.constant 4 : index
    %c1_169 = arith.constant 1 : index
    %387 = memref.load %arg4[%c4_168, %c1_169] : memref<8x10xf32, #tpu.memory_space<smem>>
    %388 = vector.broadcast %387 : f32 to vector<8x128xf32>
    %389 = arith.mulf %43, %388 : vector<8x128xf32>
    %390 = arith.addf %386, %389 : vector<8x128xf32>
    %c4_170 = arith.constant 4 : index
    %c2_171 = arith.constant 2 : index
    %391 = memref.load %arg4[%c4_170, %c2_171] : memref<8x10xf32, #tpu.memory_space<smem>>
    %392 = vector.broadcast %391 : f32 to vector<8x128xf32>
    %393 = arith.mulf %62, %392 : vector<8x128xf32>
    %394 = arith.addf %390, %393 : vector<8x128xf32>
    %c4_172 = arith.constant 4 : index
    %c3_173 = arith.constant 3 : index
    %395 = memref.load %arg4[%c4_172, %c3_173] : memref<8x10xf32, #tpu.memory_space<smem>>
    %396 = vector.broadcast %395 : f32 to vector<8x128xf32>
    %397 = arith.mulf %81, %396 : vector<8x128xf32>
    %398 = arith.addf %394, %397 : vector<8x128xf32>
    %c4_174 = arith.constant 4 : index
    %c4_175 = arith.constant 4 : index
    %399 = memref.load %arg4[%c4_174, %c4_175] : memref<8x10xf32, #tpu.memory_space<smem>>
    %400 = vector.broadcast %399 : f32 to vector<8x128xf32>
    %401 = arith.mulf %100, %400 : vector<8x128xf32>
    %402 = arith.addf %398, %401 : vector<8x128xf32>
    %c4_176 = arith.constant 4 : index
    %c5_177 = arith.constant 5 : index
    %403 = memref.load %arg4[%c4_176, %c5_177] : memref<8x10xf32, #tpu.memory_space<smem>>
    %404 = vector.broadcast %403 : f32 to vector<8x128xf32>
    %405 = arith.mulf %119, %404 : vector<8x128xf32>
    %406 = arith.addf %402, %405 : vector<8x128xf32>
    %c4_178 = arith.constant 4 : index
    %c6_179 = arith.constant 6 : index
    %407 = memref.load %arg4[%c4_178, %c6_179] : memref<8x10xf32, #tpu.memory_space<smem>>
    %408 = vector.broadcast %407 : f32 to vector<8x128xf32>
    %409 = arith.mulf %138, %408 : vector<8x128xf32>
    %410 = arith.addf %406, %409 : vector<8x128xf32>
    %c4_180 = arith.constant 4 : index
    %c7_181 = arith.constant 7 : index
    %411 = memref.load %arg4[%c4_180, %c7_181] : memref<8x10xf32, #tpu.memory_space<smem>>
    %412 = vector.broadcast %411 : f32 to vector<8x128xf32>
    %413 = arith.mulf %157, %412 : vector<8x128xf32>
    %414 = arith.addf %410, %413 : vector<8x128xf32>
    %c4_182 = arith.constant 4 : index
    %c8_183 = arith.constant 8 : index
    %415 = memref.load %arg4[%c4_182, %c8_183] : memref<8x10xf32, #tpu.memory_space<smem>>
    %416 = vector.broadcast %415 : f32 to vector<8x128xf32>
    %417 = arith.mulf %176, %416 : vector<8x128xf32>
    %418 = arith.addf %414, %417 : vector<8x128xf32>
    %c4_184 = arith.constant 4 : index
    %c9_185 = arith.constant 9 : index
    %419 = memref.load %arg4[%c4_184, %c9_185] : memref<8x10xf32, #tpu.memory_space<smem>>
    %420 = vector.broadcast %419 : f32 to vector<8x128xf32>
    %421 = arith.mulf %195, %420 : vector<8x128xf32>
    %422 = arith.addf %418, %421 : vector<8x128xf32>
    %c4_186 = arith.constant 4 : index
    %423 = memref.load %arg5[%c4_186] : memref<8xf32, #tpu.memory_space<smem>>
    %424 = vector.broadcast %423 : f32 to vector<8x128xf32>
    %425 = arith.addf %422, %424 : vector<8x128xf32>
    %426 = arith.negf %425 : vector<8x128xf32>
    %427 = math.exp %426 : vector<8x128xf32>
    %cst_187 = arith.constant 1.000000e+00 : f32
    %428 = vector.broadcast %cst_187 : f32 to vector<8x128xf32>
    %429 = arith.addf %428, %427 : vector<8x128xf32>
    %430 = arith.divf %428, %429 : vector<8x128xf32>
    %c5_188 = arith.constant 5 : index
    %c0_189 = arith.constant 0 : index
    %431 = memref.load %arg4[%c5_188, %c0_189] : memref<8x10xf32, #tpu.memory_space<smem>>
    %432 = vector.broadcast %431 : f32 to vector<8x128xf32>
    %433 = arith.mulf %24, %432 : vector<8x128xf32>
    %c5_190 = arith.constant 5 : index
    %c1_191 = arith.constant 1 : index
    %434 = memref.load %arg4[%c5_190, %c1_191] : memref<8x10xf32, #tpu.memory_space<smem>>
    %435 = vector.broadcast %434 : f32 to vector<8x128xf32>
    %436 = arith.mulf %43, %435 : vector<8x128xf32>
    %437 = arith.addf %433, %436 : vector<8x128xf32>
    %c5_192 = arith.constant 5 : index
    %c2_193 = arith.constant 2 : index
    %438 = memref.load %arg4[%c5_192, %c2_193] : memref<8x10xf32, #tpu.memory_space<smem>>
    %439 = vector.broadcast %438 : f32 to vector<8x128xf32>
    %440 = arith.mulf %62, %439 : vector<8x128xf32>
    %441 = arith.addf %437, %440 : vector<8x128xf32>
    %c5_194 = arith.constant 5 : index
    %c3_195 = arith.constant 3 : index
    %442 = memref.load %arg4[%c5_194, %c3_195] : memref<8x10xf32, #tpu.memory_space<smem>>
    %443 = vector.broadcast %442 : f32 to vector<8x128xf32>
    %444 = arith.mulf %81, %443 : vector<8x128xf32>
    %445 = arith.addf %441, %444 : vector<8x128xf32>
    %c5_196 = arith.constant 5 : index
    %c4_197 = arith.constant 4 : index
    %446 = memref.load %arg4[%c5_196, %c4_197] : memref<8x10xf32, #tpu.memory_space<smem>>
    %447 = vector.broadcast %446 : f32 to vector<8x128xf32>
    %448 = arith.mulf %100, %447 : vector<8x128xf32>
    %449 = arith.addf %445, %448 : vector<8x128xf32>
    %c5_198 = arith.constant 5 : index
    %c5_199 = arith.constant 5 : index
    %450 = memref.load %arg4[%c5_198, %c5_199] : memref<8x10xf32, #tpu.memory_space<smem>>
    %451 = vector.broadcast %450 : f32 to vector<8x128xf32>
    %452 = arith.mulf %119, %451 : vector<8x128xf32>
    %453 = arith.addf %449, %452 : vector<8x128xf32>
    %c5_200 = arith.constant 5 : index
    %c6_201 = arith.constant 6 : index
    %454 = memref.load %arg4[%c5_200, %c6_201] : memref<8x10xf32, #tpu.memory_space<smem>>
    %455 = vector.broadcast %454 : f32 to vector<8x128xf32>
    %456 = arith.mulf %138, %455 : vector<8x128xf32>
    %457 = arith.addf %453, %456 : vector<8x128xf32>
    %c5_202 = arith.constant 5 : index
    %c7_203 = arith.constant 7 : index
    %458 = memref.load %arg4[%c5_202, %c7_203] : memref<8x10xf32, #tpu.memory_space<smem>>
    %459 = vector.broadcast %458 : f32 to vector<8x128xf32>
    %460 = arith.mulf %157, %459 : vector<8x128xf32>
    %461 = arith.addf %457, %460 : vector<8x128xf32>
    %c5_204 = arith.constant 5 : index
    %c8_205 = arith.constant 8 : index
    %462 = memref.load %arg4[%c5_204, %c8_205] : memref<8x10xf32, #tpu.memory_space<smem>>
    %463 = vector.broadcast %462 : f32 to vector<8x128xf32>
    %464 = arith.mulf %176, %463 : vector<8x128xf32>
    %465 = arith.addf %461, %464 : vector<8x128xf32>
    %c5_206 = arith.constant 5 : index
    %c9_207 = arith.constant 9 : index
    %466 = memref.load %arg4[%c5_206, %c9_207] : memref<8x10xf32, #tpu.memory_space<smem>>
    %467 = vector.broadcast %466 : f32 to vector<8x128xf32>
    %468 = arith.mulf %195, %467 : vector<8x128xf32>
    %469 = arith.addf %465, %468 : vector<8x128xf32>
    %c5_208 = arith.constant 5 : index
    %470 = memref.load %arg5[%c5_208] : memref<8xf32, #tpu.memory_space<smem>>
    %471 = vector.broadcast %470 : f32 to vector<8x128xf32>
    %472 = arith.addf %469, %471 : vector<8x128xf32>
    %473 = arith.negf %472 : vector<8x128xf32>
    %474 = math.exp %473 : vector<8x128xf32>
    %cst_209 = arith.constant 1.000000e+00 : f32
    %475 = vector.broadcast %cst_209 : f32 to vector<8x128xf32>
    %476 = arith.addf %475, %474 : vector<8x128xf32>
    %477 = arith.divf %475, %476 : vector<8x128xf32>
    %c6_210 = arith.constant 6 : index
    %c0_211 = arith.constant 0 : index
    %478 = memref.load %arg4[%c6_210, %c0_211] : memref<8x10xf32, #tpu.memory_space<smem>>
    %479 = vector.broadcast %478 : f32 to vector<8x128xf32>
    %480 = arith.mulf %24, %479 : vector<8x128xf32>
    %c6_212 = arith.constant 6 : index
    %c1_213 = arith.constant 1 : index
    %481 = memref.load %arg4[%c6_212, %c1_213] : memref<8x10xf32, #tpu.memory_space<smem>>
    %482 = vector.broadcast %481 : f32 to vector<8x128xf32>
    %483 = arith.mulf %43, %482 : vector<8x128xf32>
    %484 = arith.addf %480, %483 : vector<8x128xf32>
    %c6_214 = arith.constant 6 : index
    %c2_215 = arith.constant 2 : index
    %485 = memref.load %arg4[%c6_214, %c2_215] : memref<8x10xf32, #tpu.memory_space<smem>>
    %486 = vector.broadcast %485 : f32 to vector<8x128xf32>
    %487 = arith.mulf %62, %486 : vector<8x128xf32>
    %488 = arith.addf %484, %487 : vector<8x128xf32>
    %c6_216 = arith.constant 6 : index
    %c3_217 = arith.constant 3 : index
    %489 = memref.load %arg4[%c6_216, %c3_217] : memref<8x10xf32, #tpu.memory_space<smem>>
    %490 = vector.broadcast %489 : f32 to vector<8x128xf32>
    %491 = arith.mulf %81, %490 : vector<8x128xf32>
    %492 = arith.addf %488, %491 : vector<8x128xf32>
    %c6_218 = arith.constant 6 : index
    %c4_219 = arith.constant 4 : index
    %493 = memref.load %arg4[%c6_218, %c4_219] : memref<8x10xf32, #tpu.memory_space<smem>>
    %494 = vector.broadcast %493 : f32 to vector<8x128xf32>
    %495 = arith.mulf %100, %494 : vector<8x128xf32>
    %496 = arith.addf %492, %495 : vector<8x128xf32>
    %c6_220 = arith.constant 6 : index
    %c5_221 = arith.constant 5 : index
    %497 = memref.load %arg4[%c6_220, %c5_221] : memref<8x10xf32, #tpu.memory_space<smem>>
    %498 = vector.broadcast %497 : f32 to vector<8x128xf32>
    %499 = arith.mulf %119, %498 : vector<8x128xf32>
    %500 = arith.addf %496, %499 : vector<8x128xf32>
    %c6_222 = arith.constant 6 : index
    %c6_223 = arith.constant 6 : index
    %501 = memref.load %arg4[%c6_222, %c6_223] : memref<8x10xf32, #tpu.memory_space<smem>>
    %502 = vector.broadcast %501 : f32 to vector<8x128xf32>
    %503 = arith.mulf %138, %502 : vector<8x128xf32>
    %504 = arith.addf %500, %503 : vector<8x128xf32>
    %c6_224 = arith.constant 6 : index
    %c7_225 = arith.constant 7 : index
    %505 = memref.load %arg4[%c6_224, %c7_225] : memref<8x10xf32, #tpu.memory_space<smem>>
    %506 = vector.broadcast %505 : f32 to vector<8x128xf32>
    %507 = arith.mulf %157, %506 : vector<8x128xf32>
    %508 = arith.addf %504, %507 : vector<8x128xf32>
    %c6_226 = arith.constant 6 : index
    %c8_227 = arith.constant 8 : index
    %509 = memref.load %arg4[%c6_226, %c8_227] : memref<8x10xf32, #tpu.memory_space<smem>>
    %510 = vector.broadcast %509 : f32 to vector<8x128xf32>
    %511 = arith.mulf %176, %510 : vector<8x128xf32>
    %512 = arith.addf %508, %511 : vector<8x128xf32>
    %c6_228 = arith.constant 6 : index
    %c9_229 = arith.constant 9 : index
    %513 = memref.load %arg4[%c6_228, %c9_229] : memref<8x10xf32, #tpu.memory_space<smem>>
    %514 = vector.broadcast %513 : f32 to vector<8x128xf32>
    %515 = arith.mulf %195, %514 : vector<8x128xf32>
    %516 = arith.addf %512, %515 : vector<8x128xf32>
    %c6_230 = arith.constant 6 : index
    %517 = memref.load %arg5[%c6_230] : memref<8xf32, #tpu.memory_space<smem>>
    %518 = vector.broadcast %517 : f32 to vector<8x128xf32>
    %519 = arith.addf %516, %518 : vector<8x128xf32>
    %520 = arith.negf %519 : vector<8x128xf32>
    %521 = math.exp %520 : vector<8x128xf32>
    %cst_231 = arith.constant 1.000000e+00 : f32
    %522 = vector.broadcast %cst_231 : f32 to vector<8x128xf32>
    %523 = arith.addf %522, %521 : vector<8x128xf32>
    %524 = arith.divf %522, %523 : vector<8x128xf32>
    %c7_232 = arith.constant 7 : index
    %c0_233 = arith.constant 0 : index
    %525 = memref.load %arg4[%c7_232, %c0_233] : memref<8x10xf32, #tpu.memory_space<smem>>
    %526 = vector.broadcast %525 : f32 to vector<8x128xf32>
    %527 = arith.mulf %24, %526 : vector<8x128xf32>
    %c7_234 = arith.constant 7 : index
    %c1_235 = arith.constant 1 : index
    %528 = memref.load %arg4[%c7_234, %c1_235] : memref<8x10xf32, #tpu.memory_space<smem>>
    %529 = vector.broadcast %528 : f32 to vector<8x128xf32>
    %530 = arith.mulf %43, %529 : vector<8x128xf32>
    %531 = arith.addf %527, %530 : vector<8x128xf32>
    %c7_236 = arith.constant 7 : index
    %c2_237 = arith.constant 2 : index
    %532 = memref.load %arg4[%c7_236, %c2_237] : memref<8x10xf32, #tpu.memory_space<smem>>
    %533 = vector.broadcast %532 : f32 to vector<8x128xf32>
    %534 = arith.mulf %62, %533 : vector<8x128xf32>
    %535 = arith.addf %531, %534 : vector<8x128xf32>
    %c7_238 = arith.constant 7 : index
    %c3_239 = arith.constant 3 : index
    %536 = memref.load %arg4[%c7_238, %c3_239] : memref<8x10xf32, #tpu.memory_space<smem>>
    %537 = vector.broadcast %536 : f32 to vector<8x128xf32>
    %538 = arith.mulf %81, %537 : vector<8x128xf32>
    %539 = arith.addf %535, %538 : vector<8x128xf32>
    %c7_240 = arith.constant 7 : index
    %c4_241 = arith.constant 4 : index
    %540 = memref.load %arg4[%c7_240, %c4_241] : memref<8x10xf32, #tpu.memory_space<smem>>
    %541 = vector.broadcast %540 : f32 to vector<8x128xf32>
    %542 = arith.mulf %100, %541 : vector<8x128xf32>
    %543 = arith.addf %539, %542 : vector<8x128xf32>
    %c7_242 = arith.constant 7 : index
    %c5_243 = arith.constant 5 : index
    %544 = memref.load %arg4[%c7_242, %c5_243] : memref<8x10xf32, #tpu.memory_space<smem>>
    %545 = vector.broadcast %544 : f32 to vector<8x128xf32>
    %546 = arith.mulf %119, %545 : vector<8x128xf32>
    %547 = arith.addf %543, %546 : vector<8x128xf32>
    %c7_244 = arith.constant 7 : index
    %c6_245 = arith.constant 6 : index
    %548 = memref.load %arg4[%c7_244, %c6_245] : memref<8x10xf32, #tpu.memory_space<smem>>
    %549 = vector.broadcast %548 : f32 to vector<8x128xf32>
    %550 = arith.mulf %138, %549 : vector<8x128xf32>
    %551 = arith.addf %547, %550 : vector<8x128xf32>
    %c7_246 = arith.constant 7 : index
    %c7_247 = arith.constant 7 : index
    %552 = memref.load %arg4[%c7_246, %c7_247] : memref<8x10xf32, #tpu.memory_space<smem>>
    %553 = vector.broadcast %552 : f32 to vector<8x128xf32>
    %554 = arith.mulf %157, %553 : vector<8x128xf32>
    %555 = arith.addf %551, %554 : vector<8x128xf32>
    %c7_248 = arith.constant 7 : index
    %c8_249 = arith.constant 8 : index
    %556 = memref.load %arg4[%c7_248, %c8_249] : memref<8x10xf32, #tpu.memory_space<smem>>
    %557 = vector.broadcast %556 : f32 to vector<8x128xf32>
    %558 = arith.mulf %176, %557 : vector<8x128xf32>
    %559 = arith.addf %555, %558 : vector<8x128xf32>
    %c7_250 = arith.constant 7 : index
    %c9_251 = arith.constant 9 : index
    %560 = memref.load %arg4[%c7_250, %c9_251] : memref<8x10xf32, #tpu.memory_space<smem>>
    %561 = vector.broadcast %560 : f32 to vector<8x128xf32>
    %562 = arith.mulf %195, %561 : vector<8x128xf32>
    %563 = arith.addf %559, %562 : vector<8x128xf32>
    %c7_252 = arith.constant 7 : index
    %564 = memref.load %arg5[%c7_252] : memref<8xf32, #tpu.memory_space<smem>>
    %565 = vector.broadcast %564 : f32 to vector<8x128xf32>
    %566 = arith.addf %563, %565 : vector<8x128xf32>
    %567 = arith.negf %566 : vector<8x128xf32>
    %568 = math.exp %567 : vector<8x128xf32>
    %cst_253 = arith.constant 1.000000e+00 : f32
    %569 = vector.broadcast %cst_253 : f32 to vector<8x128xf32>
    %570 = arith.addf %569, %568 : vector<8x128xf32>
    %571 = arith.divf %569, %570 : vector<8x128xf32>
    %c0_254 = arith.constant 0 : index
    %c0_255 = arith.constant 0 : index
    %572 = memref.load %arg6[%c0_254, %c0_255] : memref<1x8xf32, #tpu.memory_space<smem>>
    %573 = vector.broadcast %572 : f32 to vector<8x128xf32>
    %574 = arith.mulf %242, %573 : vector<8x128xf32>
    %c0_256 = arith.constant 0 : index
    %c1_257 = arith.constant 1 : index
    %575 = memref.load %arg6[%c0_256, %c1_257] : memref<1x8xf32, #tpu.memory_space<smem>>
    %576 = vector.broadcast %575 : f32 to vector<8x128xf32>
    %577 = arith.mulf %289, %576 : vector<8x128xf32>
    %578 = arith.addf %574, %577 : vector<8x128xf32>
    %c0_258 = arith.constant 0 : index
    %c2_259 = arith.constant 2 : index
    %579 = memref.load %arg6[%c0_258, %c2_259] : memref<1x8xf32, #tpu.memory_space<smem>>
    %580 = vector.broadcast %579 : f32 to vector<8x128xf32>
    %581 = arith.mulf %336, %580 : vector<8x128xf32>
    %582 = arith.addf %578, %581 : vector<8x128xf32>
    %c0_260 = arith.constant 0 : index
    %c3_261 = arith.constant 3 : index
    %583 = memref.load %arg6[%c0_260, %c3_261] : memref<1x8xf32, #tpu.memory_space<smem>>
    %584 = vector.broadcast %583 : f32 to vector<8x128xf32>
    %585 = arith.mulf %383, %584 : vector<8x128xf32>
    %586 = arith.addf %582, %585 : vector<8x128xf32>
    %c0_262 = arith.constant 0 : index
    %c4_263 = arith.constant 4 : index
    %587 = memref.load %arg6[%c0_262, %c4_263] : memref<1x8xf32, #tpu.memory_space<smem>>
    %588 = vector.broadcast %587 : f32 to vector<8x128xf32>
    %589 = arith.mulf %430, %588 : vector<8x128xf32>
    %590 = arith.addf %586, %589 : vector<8x128xf32>
    %c0_264 = arith.constant 0 : index
    %c5_265 = arith.constant 5 : index
    %591 = memref.load %arg6[%c0_264, %c5_265] : memref<1x8xf32, #tpu.memory_space<smem>>
    %592 = vector.broadcast %591 : f32 to vector<8x128xf32>
    %593 = arith.mulf %477, %592 : vector<8x128xf32>
    %594 = arith.addf %590, %593 : vector<8x128xf32>
    %c0_266 = arith.constant 0 : index
    %c6_267 = arith.constant 6 : index
    %595 = memref.load %arg6[%c0_266, %c6_267] : memref<1x8xf32, #tpu.memory_space<smem>>
    %596 = vector.broadcast %595 : f32 to vector<8x128xf32>
    %597 = arith.mulf %524, %596 : vector<8x128xf32>
    %598 = arith.addf %594, %597 : vector<8x128xf32>
    %c0_268 = arith.constant 0 : index
    %c7_269 = arith.constant 7 : index
    %599 = memref.load %arg6[%c0_268, %c7_269] : memref<1x8xf32, #tpu.memory_space<smem>>
    %600 = vector.broadcast %599 : f32 to vector<8x128xf32>
    %601 = arith.mulf %571, %600 : vector<8x128xf32>
    %602 = arith.addf %598, %601 : vector<8x128xf32>
    %c0_270 = arith.constant 0 : index
    %603 = memref.load %arg7[%c0_270] : memref<1xf32, #tpu.memory_space<smem>>
    %604 = vector.broadcast %603 : f32 to vector<8x128xf32>
    %605 = arith.addf %602, %604 : vector<8x128xf32>
    %c0_271 = arith.constant 0 : index
    %c0_272 = arith.constant 0 : index
    %606 = vector.load %arg8[%c0_271, %c0_272] : memref<8x128xf32, #tpu.memory_space<vmem>>, vector<8x128xf32>
    tpu.vector_store %arg8[%c0_271, %c0_272], %605 {strides = array<i32>} : memref<8x128xf32, #tpu.memory_space<vmem>>, vector<8x128xf32>,
    return
  }
  func.func @transform_0(%arg0: i32) -> (i32, i32, i32) {
    %c0_i32 = arith.constant 0 : i32
    %c0_i32_0 = arith.constant 0 : i32
    %c0_i32_1 = arith.constant 0 : i32
    return %c0_i32, %arg0, %c0_i32_0 : i32, i32, i32
  }
  func.func @transform_1(%arg0: i32) -> (i32, i32) {
    %c0_i32 = arith.constant 0 : i32
    %c0_i32_0 = arith.constant 0 : i32
    %c0_i32_1 = arith.constant 0 : i32
    return %c0_i32, %c0_i32_0 : i32, i32
  }
  func.func @transform_2(%arg0: i32) -> i32 {
    %c0_i32 = arith.constant 0 : i32
    %c0_i32_0 = arith.constant 0 : i32
    return %c0_i32 : i32
  }
  func.func @transform_3(%arg0: i32) -> (i32, i32) {
    %c0_i32 = arith.constant 0 : i32
    %c0_i32_0 = arith.constant 0 : i32
    %c0_i32_1 = arith.constant 0 : i32
    return %c0_i32, %c0_i32_0 : i32, i32
  }
  func.func @transform_4(%arg0: i32) -> i32 {
    %c0_i32 = arith.constant 0 : i32
    %c0_i32_0 = arith.constant 0 : i32
    return %c0_i32 : i32
  }
  func.func @transform_5(%arg0: i32) -> (i32, i32) {
    %c0_i32 = arith.constant 0 : i32
    %c0_i32_0 = arith.constant 0 : i32
    %c0_i32_1 = arith.constant 0 : i32
    return %c0_i32, %c0_i32_0 : i32, i32
  }
  func.func @transform_6(%arg0: i32) -> i32 {
    %c0_i32 = arith.constant 0 : i32
    %c0_i32_0 = arith.constant 0 : i32
    return %c0_i32 : i32
  }
  func.func @transform_7(%arg0: i32) -> (i32, i32) {
    %c0_i32 = arith.constant 0 : i32
    %c0_i32_0 = arith.constant 0 : i32
    return %arg0, %c0_i32 : i32, i32
  }
}

</mosaic_0001>

<llo_original>
// kernel: tpu_custom_call.1
$region0: #{tpu_custom_call.1}
  #allocation0 [shape = 'u32[]', space=smem, size = 0x4, offset = 0x4, fixed_abs, tag = 'smem constant byte address 0x4 - core index']
  #allocation1 [shape = 'u32[144,128]{1,0:T(1,128)}', space=vmem, size = 0x12000, scoped, tag = 'internal scratch']
  #allocation2 [shape = 'f32[1]{0:T(128)S(6)}', space=smem, size = 0x200, scoped, tag = 'scoped memory for tpu_custom_call.1']
  %s0 = inlined_call_operand.hbm [shape: f32[3,8,128], index: 0, kind: input, shape index: {}]
  %s1 = inlined_call_operand.vmem [shape: f32[10,3], index: 1, kind: input, shape index: {}]
  %s2 = inlined_call_operand.vmem [shape: f32[10], index: 2, kind: input, shape index: {}]
  %s3 = inlined_call_operand.vmem [shape: f32[8,10], index: 3, kind: input, shape index: {}]
  %s4 = inlined_call_operand.vmem [shape: f32[8], index: 4, kind: input, shape index: {}]
  %s5 = inlined_call_operand.vmem [shape: f32[1,8], index: 5, kind: input, shape index: {}]
  %s6 = inlined_call_operand.<no memory space> [shape: f32[1], index: 6, kind: input, shape index: {}]
  %s7 = inlined_call_operand.hbm [shape: f32[8,128], index: 7, kind: output, shape index: {}]
  %s8 = sld [smem:[#allocation0]]
  $region62: #{tpu_custom_call.1} parent=0
    _
  %s10 = ssub.s32 1, %s8
  %s11 = scalar_select 0, %s10, %s8
  %12 = sst [smem:[#allocation2]] %s6
  $region1: #{tpu_custom_call.1} parent=0
    #allocation3 [shape = 'u8[12288]{0}', space=vmem, size = 0x3000, scoped, tag = 'input window, operand 0, single buffered']
    #allocation4 [shape = 's32[1]{0}', space=sflag, size = 0x4, scoped, tag = 'scoped memory for tpu_custom_call.1']
    #allocation5 [shape = 's32[1]{0}', space=sflag, size = 0x4, scoped, tag = 'scoped memory for tpu_custom_call.1']
    #allocation6 [shape = 's32[1]{0}', space=sflag, size = 0x4, scoped, tag = 'scoped memory for tpu_custom_call.1']
    #allocation7 [shape = 'u8[8192]{0}', space=smem, size = 0x2000, scoped, tag = 'input window, operand 1, single buffered']
    #allocation8 [shape = 'u8[512]{0}', space=smem, size = 0x200, scoped, tag = 'input window, operand 2, single buffered']
    #allocation9 [shape = 's32[1]{0}', space=sflag, size = 0x4, scoped, tag = 'scoped memory for tpu_custom_call.1']
    #allocation10 [shape = 'u8[4096]{0}', space=smem, size = 0x1000, scoped, tag = 'input window, operand 3, single buffered']
    #allocation11 [shape = 'u8[512]{0}', space=smem, size = 0x200, scoped, tag = 'input window, operand 4, single buffered']
    #allocation12 [shape = 's32[1]{0}', space=sflag, size = 0x4, scoped, tag = 'scoped memory for tpu_custom_call.1']
    #allocation13 [shape = 'u8[512]{0}', space=smem, size = 0x200, scoped, tag = 'input window, operand 5, single buffered']
    #allocation14 [shape = 'u8[4096]{0}', space=vmem, size = 0x1000, scoped, tag = 'output window, operand 0, single buffered']
    %13 = vsyncpa [#allocation4], 0
    %14 = vsyncpa [#allocation6], 0
    %15 = vsyncpa [#allocation9], 0
    %16 = vsyncpa [#allocation12], 0
    %17 = vsyncpa [#allocation5], 0
    // Predicated region
    $region2: #{tpu_custom_call.1} parent=1 // pred_check
      _
    $region3: #{tpu_custom_call.1} parent=1 // pred_check_branch
      %19 = sbr.rel (0) target = $region5
    $region4: #{tpu_custom_call.1} parent=1 // pred_region
      %s21 = ssub.s32 384, 384
      %22 = vsyncadd [#allocation4], %s21
      %s23 = sshll.u32 [#allocation3], 4
      %s24 = int_to_ptr.vmem [resolvable:$true] %s23
      %29 = dma.hbm_to_vmem [thread:$0]  %s0, 384, %s24, [#allocation4], 128, 128, 8
    $region5: #{tpu_custom_call.1} parent=1 // pred_fallthru
      _
    // Predicated region
    $region6: #{tpu_custom_call.1} parent=1 // pred_check
      _
    $region7: #{tpu_custom_call.1} parent=1 // pred_check_branch
      %31 = sbr.rel (0) target = $region9
    $region8: #{tpu_custom_call.1} parent=1 // pred_region
      %s33 = ssub.s32 256, 256
      %34 = vsyncadd [#allocation6], %s33
      %s35 = sshll.u32 %s1, 4
      %s36 = int_to_ptr.vmem [resolvable:$true] %s35
      %41 = dma.vmem_to_smem %s36, 256, [#allocation7], [#allocation6], 128, 128, 8
    $region9: #{tpu_custom_call.1} parent=1 // pred_fallthru
      _
    // Predicated region
    $region10: #{tpu_custom_call.1} parent=1 // pred_check
      _
    $region11: #{tpu_custom_call.1} parent=1 // pred_check_branch
      %43 = sbr.rel (0) target = $region13
    $region12: #{tpu_custom_call.1} parent=1 // pred_region
      %s45 = ssub.s32 16, 16
      %46 = vsyncadd [#allocation9], %s45
      %s48 = sshll.u32 %s2, 4
      %s49 = int_to_ptr.vmem [resolvable:$true] %s48
      %51 = dma.vmem_to_smem %s49, 16, [#allocation8], [#allocation9]
    $region13: #{tpu_custom_call.1} parent=1 // pred_fallthru
      _
    // Predicated region
    $region14: #{tpu_custom_call.1} parent=1 // pred_check
      _
    $region15: #{tpu_custom_call.1} parent=1 // pred_check_branch
      %53 = sbr.rel (0) target = $region17
    $region16: #{tpu_custom_call.1} parent=1 // pred_region
      %s55 = ssub.s32 128, 128
      %56 = vsyncadd [#allocation9], %s55
      %s58 = sshll.u32 %s3, 4
      %s59 = int_to_ptr.vmem [resolvable:$true] %s58
      %61 = dma.vmem_to_smem %s59, 128, [#allocation10], [#allocation9]
    $region17: #{tpu_custom_call.1} parent=1 // pred_fallthru
      _
    // Predicated region
    $region18: #{tpu_custom_call.1} parent=1 // pred_check
      _
    $region19: #{tpu_custom_call.1} parent=1 // pred_check_branch
      %63 = sbr.rel (0) target = $region21
    $region20: #{tpu_custom_call.1} parent=1 // pred_region
      %s65 = ssub.s32 16, 16
      %66 = vsyncadd [#allocation12], %s65
      %s68 = sshll.u32 %s4, 4
      %s69 = int_to_ptr.vmem [resolvable:$true] %s68
      %71 = dma.vmem_to_smem %s69, 16, [#allocation11], [#allocation12]
    $region21: #{tpu_custom_call.1} parent=1 // pred_fallthru
      _
    // Predicated region
    $region22: #{tpu_custom_call.1} parent=1 // pred_check
      _
    $region23: #{tpu_custom_call.1} parent=1 // pred_check_branch
      %73 = sbr.rel (0) target = $region25
    $region24: #{tpu_custom_call.1} parent=1 // pred_region
      %s75 = ssub.s32 16, 16
      %76 = vsyncadd [#allocation12], %s75
      %s78 = sshll.u32 %s5, 4
      %s79 = int_to_ptr.vmem [resolvable:$true] %s78
      %81 = dma.vmem_to_smem %s79, 16, [#allocation13], [#allocation12]
    $region25: #{tpu_custom_call.1} parent=1 // pred_fallthru
      _
    // Predicated region
    $region26: #{tpu_custom_call.1} parent=1 // pred_check
      _
    $region27: #{tpu_custom_call.1} parent=1 // pred_check_branch
      %83 = sbr.rel (0) target = $region29
    $region28: #{tpu_custom_call.1} parent=1 // pred_region
      _
    $region29: #{tpu_custom_call.1} parent=1 // pred_fallthru
      _
    // Predicated region
    $region30: #{tpu_custom_call.1} parent=1 // pred_check
      _
    $region31: #{tpu_custom_call.1} parent=1 // pred_check_branch
      %85 = sbr.rel (0) target = $region33
    $region32: #{tpu_custom_call.1} parent=1 // pred_region
      %86 = dma.done [#allocation4], 384
    $region33: #{tpu_custom_call.1} parent=1 // pred_fallthru
      _
    // Predicated region
    $region34: #{tpu_custom_call.1} parent=1 // pred_check
      _
    $region35: #{tpu_custom_call.1} parent=1 // pred_check_branch
      %88 = sbr.rel (0) target = $region37
    $region36: #{tpu_custom_call.1} parent=1 // pred_region
      %89 = dma.done [#allocation6], 256
    $region37: #{tpu_custom_call.1} parent=1 // pred_fallthru
      _
    // Predicated region
    $region38: #{tpu_custom_call.1} parent=1 // pred_check
      _
    $region39: #{tpu_custom_call.1} parent=1 // pred_check_branch
      %91 = sbr.rel (0) target = $region41
    $region40: #{tpu_custom_call.1} parent=1 // pred_region
      %92 = dma.done [#allocation9], 16
    $region41: #{tpu_custom_call.1} parent=1 // pred_fallthru
      _
    // Predicated region
    $region42: #{tpu_custom_call.1} parent=1 // pred_check
      _
    $region43: #{tpu_custom_call.1} parent=1 // pred_check_branch
      %94 = sbr.rel (0) target = $region45
    $region44: #{tpu_custom_call.1} parent=1 // pred_region
      %95 = dma.done [#allocation9], 128
    $region45: #{tpu_custom_call.1} parent=1 // pred_fallthru
      _
    // Predicated region
    $region46: #{tpu_custom_call.1} parent=1 // pred_check
      _
    $region47: #{tpu_custom_call.1} parent=1 // pred_check_branch
      %97 = sbr.rel (0) target = $region49
    $region48: #{tpu_custom_call.1} parent=1 // pred_region
      %98 = dma.done [#allocation12], 16
    $region49: #{tpu_custom_call.1} parent=1 // pred_fallthru
      _
    // Predicated region
    $region50: #{tpu_custom_call.1} parent=1 // pred_check
      _
    $region51: #{tpu_custom_call.1} parent=1 // pred_check_branch
      %100 = sbr.rel (0) target = $region53
    $region52: #{tpu_custom_call.1} parent=1 // pred_region
      %101 = dma.done [#allocation12], 16
    $region53: #{tpu_custom_call.1} parent=1 // pred_fallthru
      _
    %102 = sfence
    %v103 = vld [vmem:[#allocation3] sm:$0xff]
    %s104 = scalar_lea.vmem [#allocation3], 8
    %v105 = vld [vmem:[%s104] sm:$0xff]
    %s106 = scalar_lea.vmem [#allocation3], 16
    %v107 = vld [vmem:[%s106] sm:$0xff]
    %s108 = sld [smem:[#allocation7]]
    %v109 = vstv %s108
    %v110 = vmul.f32 %v103, %v109
    %s111 = sld [smem:[#allocation7 + $0x1]]
    %v112 = vstv %s111
    %v113 = vmul.f32 %v105, %v112
    %v114 = vadd.f32 %v110, %v113
    %s115 = sld [smem:[#allocation7 + $0x2]]
    %v116 = vstv %s115
    %v117 = vmul.f32 %v107, %v116
    %v118 = vadd.f32 %v114, %v117
    %s119 = sld [smem:[#allocation8]]
    %v120 = vstv %s119
    %v121 = vadd.f32 %v118, %v120
    %v122 = vxor.u32 %v121, 2147483648
    %v123 = vmul.f32 %v122, 1.442695
    %v124 = vpow.pop %v123
    %v125 = vadd.f32 %v124, 1.0
    %v126 = vrcp.pop %v125
    %v127 = vmul.f32 1.0, %v126
    %s128 = sld [smem:[#allocation7 + $0x80]]
    %v129 = vstv %s128
    %v130 = vmul.f32 %v103, %v129
    %s131 = sld [smem:[#allocation7 + $0x81]]
    %v132 = vstv %s131
    %v133 = vmul.f32 %v105, %v132
    %v134 = vadd.f32 %v130, %v133
    %s135 = sld [smem:[#allocation7 + $0x82]]
    %v136 = vstv %s135
    %v137 = vmul.f32 %v107, %v136
    %v138 = vadd.f32 %v134, %v137
    %s139 = sld [smem:[#allocation8 + $0x1]]
    %v140 = vstv %s139
    %v141 = vadd.f32 %v138, %v140
    %v142 = vxor.u32 %v141, 2147483648
    %v143 = vmul.f32 %v142, 1.442695
    %v144 = vpow.pop %v143
    %v145 = vadd.f32 %v144, 1.0
    %v146 = vrcp.pop %v145
    %v147 = vmul.f32 1.0, %v146
    %s148 = sld [smem:[#allocation7 + $0x100]]
    %v149 = vstv %s148
    %v150 = vmul.f32 %v103, %v149
    %s151 = sld [smem:[#allocation7 + $0x101]]
    %v152 = vstv %s151
    %v153 = vmul.f32 %v105, %v152
    %v154 = vadd.f32 %v150, %v153
    %s155 = sld [smem:[#allocation7 + $0x102]]
    %v156 = vstv %s155
    %v157 = vmul.f32 %v107, %v156
    %v158 = vadd.f32 %v154, %v157
    %s159 = sld [smem:[#allocation8 + $0x2]]
    %v160 = vstv %s159
    %v161 = vadd.f32 %v158, %v160
    %v162 = vxor.u32 %v161, 2147483648
    %v163 = vmul.f32 %v162, 1.442695
    %v164 = vpow.pop %v163
    %v165 = vadd.f32 %v164, 1.0
    %v166 = vrcp.pop %v165
    %v167 = vmul.f32 1.0, %v166
    %s168 = sld [smem:[#allocation7 + $0x180]]
    %v169 = vstv %s168
    %v170 = vmul.f32 %v103, %v169
    %s171 = sld [smem:[#allocation7 + $0x181]]
    %v172 = vstv %s171
    %v173 = vmul.f32 %v105, %v172
    %v174 = vadd.f32 %v170, %v173
    %s175 = sld [smem:[#allocation7 + $0x182]]
    %v176 = vstv %s175
    %v177 = vmul.f32 %v107, %v176
    %v178 = vadd.f32 %v174, %v177
    %s179 = sld [smem:[#allocation8 + $0x3]]
    %v180 = vstv %s179
    %v181 = vadd.f32 %v178, %v180
    %v182 = vxor.u32 %v181, 2147483648
    %v183 = vmul.f32 %v182, 1.442695
    %v184 = vpow.pop %v183
    %v185 = vadd.f32 %v184, 1.0
    %v186 = vrcp.pop %v185
    %v187 = vmul.f32 1.0, %v186
    %s188 = sld [smem:[#allocation7 + $0x200]]
    %v189 = vstv %s188
    %v190 = vmul.f32 %v103, %v189
    %s191 = sld [smem:[#allocation7 + $0x201]]
    %v192 = vstv %s191
    %v193 = vmul.f32 %v105, %v192
    %v194 = vadd.f32 %v190, %v193
    %s195 = sld [smem:[#allocation7 + $0x202]]
    %v196 = vstv %s195
    %v197 = vmul.f32 %v107, %v196
    %v198 = vadd.f32 %v194, %v197
    %s199 = sld [smem:[#allocation8 + $0x4]]
    %v200 = vstv %s199
    %v201 = vadd.f32 %v198, %v200
    %v202 = vxor.u32 %v201, 2147483648
    %v203 = vmul.f32 %v202, 1.442695
    %v204 = vpow.pop %v203
    %v205 = vadd.f32 %v204, 1.0
    %v206 = vrcp.pop %v205
    %v207 = vmul.f32 1.0, %v206
    %s208 = sld [smem:[#allocation7 + $0x280]]
    %v209 = vstv %s208
    %v210 = vmul.f32 %v103, %v209
    %s211 = sld [smem:[#allocation7 + $0x281]]
    %v212 = vstv %s211
    %v213 = vmul.f32 %v105, %v212
    %v214 = vadd.f32 %v210, %v213
    %s215 = sld [smem:[#allocation7 + $0x282]]
    %v216 = vstv %s215
    %v217 = vmul.f32 %v107, %v216
    %v218 = vadd.f32 %v214, %v217
    %s219 = sld [smem:[#allocation8 + $0x5]]
    %v220 = vstv %s219
    %v221 = vadd.f32 %v218, %v220
    %v222 = vxor.u32 %v221, 2147483648
    %v223 = vmul.f32 %v222, 1.442695
    %v224 = vpow.pop %v223
    %v225 = vadd.f32 %v224, 1.0
    %v226 = vrcp.pop %v225
    %v227 = vmul.f32 1.0, %v226
    %s228 = sld [smem:[#allocation7 + $0x300]]
    %v229 = vstv %s228
    %v230 = vmul.f32 %v103, %v229
    %s231 = sld [smem:[#allocation7 + $0x301]]
    %v232 = vstv %s231
    %v233 = vmul.f32 %v105, %v232
    %v234 = vadd.f32 %v230, %v233
    %s235 = sld [smem:[#allocation7 + $0x302]]
    %v236 = vstv %s235
    %v237 = vmul.f32 %v107, %v236
    %v238 = vadd.f32 %v234, %v237
    %s239 = sld [smem:[#allocation8 + $0x6]]
    %v240 = vstv %s239
    %v241 = vadd.f32 %v238, %v240
    %v242 = vxor.u32 %v241, 2147483648
    %v243 = vmul.f32 %v242, 1.442695
    %v244 = vpow.pop %v243
    %v245 = vadd.f32 %v244, 1.0
    %v246 = vrcp.pop %v245
    %v247 = vmul.f32 1.0, %v246
    %s248 = sld [smem:[#allocation7 + $0x380]]
    %v249 = vstv %s248
    %v250 = vmul.f32 %v103, %v249
    %s251 = sld [smem:[#allocation7 + $0x381]]
    %v252 = vstv %s251
    %v253 = vmul.f32 %v105, %v252
    %v254 = vadd.f32 %v250, %v253
    %s255 = sld [smem:[#allocation7 + $0x382]]
    %v256 = vstv %s255
    %v257 = vmul.f32 %v107, %v256
    %v258 = vadd.f32 %v254, %v257
    %s259 = sld [smem:[#allocation8 + $0x7]]
    %v260 = vstv %s259
    %v261 = vadd.f32 %v258, %v260
    %v262 = vxor.u32 %v261, 2147483648
    %v263 = vmul.f32 %v262, 1.442695
    %v264 = vpow.pop %v263
    %v265 = vadd.f32 %v264, 1.0
    %v266 = vrcp.pop %v265
    %v267 = vmul.f32 1.0, %v266
    %s268 = sld [smem:[#allocation7 + $0x400]]
    %v269 = vstv %s268
    %v270 = vmul.f32 %v103, %v269
    %s271 = sld [smem:[#allocation7 + $0x401]]
    %v272 = vstv %s271
    %v273 = vmul.f32 %v105, %v272
    %v274 = vadd.f32 %v270, %v273
    %s275 = sld [smem:[#allocation7 + $0x402]]
    %v276 = vstv %s275
    %v277 = vmul.f32 %v107, %v276
    %v278 = vadd.f32 %v274, %v277
    %s279 = sld [smem:[#allocation8 + $0x8]]
    %v280 = vstv %s279
    %v281 = vadd.f32 %v278, %v280
    %v282 = vxor.u32 %v281, 2147483648
    %v283 = vmul.f32 %v282, 1.442695
    %v284 = vpow.pop %v283
    %v285 = vadd.f32 %v284, 1.0
    %v286 = vrcp.pop %v285
    %v287 = vmul.f32 1.0, %v286
    %s288 = sld [smem:[#allocation7 + $0x480]]
    %v289 = vstv %s288
    %v290 = vmul.f32 %v103, %v289
    %s291 = sld [smem:[#allocation7 + $0x481]]
    %v292 = vstv %s291
    %v293 = vmul.f32 %v105, %v292
    %v294 = vadd.f32 %v290, %v293
    %s295 = sld [smem:[#allocation7 + $0x482]]
    %v296 = vstv %s295
    %v297 = vmul.f32 %v107, %v296
    %v298 = vadd.f32 %v294, %v297
    %s299 = sld [smem:[#allocation8 + $0x9]]
    %v300 = vstv %s299
    %v301 = vadd.f32 %v298, %v300
    %v302 = vxor.u32 %v301, 2147483648
    %v303 = vmul.f32 %v302, 1.442695
    %v304 = vpow.pop %v303
    %v305 = vadd.f32 %v304, 1.0
    %v306 = vrcp.pop %v305
    %v307 = vmul.f32 1.0, %v306
    %s308 = sld [smem:[#allocation10]]
    %v309 = vstv %s308
    %v310 = vmul.f32 %v127, %v309
    %s311 = sld [smem:[#allocation10 + $0x1]]
    %v312 = vstv %s311
    %v313 = vmul.f32 %v147, %v312
    %v314 = vadd.f32 %v310, %v313
    %s315 = sld [smem:[#allocation10 + $0x2]]
    %v316 = vstv %s315
    %v317 = vmul.f32 %v167, %v316
    %v318 = vadd.f32 %v314, %v317
    %s319 = sld [smem:[#allocation10 + $0x3]]
    %v320 = vstv %s319
    %v321 = vmul.f32 %v187, %v320
    %v322 = vadd.f32 %v318, %v321
    %s323 = sld [smem:[#allocation10 + $0x4]]
    %v324 = vstv %s323
    %v325 = vmul.f32 %v207, %v324
    %v326 = vadd.f32 %v322, %v325
    %s327 = sld [smem:[#allocation10 + $0x5]]
    %v328 = vstv %s327
    %v329 = vmul.f32 %v227, %v328
    %v330 = vadd.f32 %v326, %v329
    %s331 = sld [smem:[#allocation10 + $0x6]]
    %v332 = vstv %s331
    %v333 = vmul.f32 %v247, %v332
    %v334 = vadd.f32 %v330, %v333
    %s335 = sld [smem:[#allocation10 + $0x7]]
    %v336 = vstv %s335
    %v337 = vmul.f32 %v267, %v336
    %v338 = vadd.f32 %v334, %v337
    %s339 = sld [smem:[#allocation10 + $0x8]]
    %v340 = vstv %s339
    %v341 = vmul.f32 %v287, %v340
    %v342 = vadd.f32 %v338, %v341
    %s343 = sld [smem:[#allocation10 + $0x9]]
    %v344 = vstv %s343
    %v345 = vmul.f32 %v307, %v344
    %v346 = vadd.f32 %v342, %v345
    %s347 = sld [smem:[#allocation11]]
    %v348 = vstv %s347
    %v349 = vadd.f32 %v346, %v348
    %v350 = vxor.u32 %v349, 2147483648
    %v351 = vmul.f32 %v350, 1.442695
    %v352 = vpow.pop %v351
    %v353 = vadd.f32 %v352, 1.0
    %v354 = vrcp.pop %v353
    %v355 = vmul.f32 1.0, %v354
    %s356 = sld [smem:[#allocation10 + $0x80]]
    %v357 = vstv %s356
    %v358 = vmul.f32 %v127, %v357
    %s359 = sld [smem:[#allocation10 + $0x81]]
    %v360 = vstv %s359
    %v361 = vmul.f32 %v147, %v360
    %v362 = vadd.f32 %v358, %v361
    %s363 = sld [smem:[#allocation10 + $0x82]]
    %v364 = vstv %s363
    %v365 = vmul.f32 %v167, %v364
    %v366 = vadd.f32 %v362, %v365
    %s367 = sld [smem:[#allocation10 + $0x83]]
    %v368 = vstv %s367
    %v369 = vmul.f32 %v187, %v368
    %v370 = vadd.f32 %v366, %v369
    %s371 = sld [smem:[#allocation10 + $0x84]]
    %v372 = vstv %s371
    %v373 = vmul.f32 %v207, %v372
    %v374 = vadd.f32 %v370, %v373
    %s375 = sld [smem:[#allocation10 + $0x85]]
    %v376 = vstv %s375
    %v377 = vmul.f32 %v227, %v376
    %v378 = vadd.f32 %v374, %v377
    %s379 = sld [smem:[#allocation10 + $0x86]]
    %v380 = vstv %s379
    %v381 = vmul.f32 %v247, %v380
    %v382 = vadd.f32 %v378, %v381
    %s383 = sld [smem:[#allocation10 + $0x87]]
    %v384 = vstv %s383
    %v385 = vmul.f32 %v267, %v384
    %v386 = vadd.f32 %v382, %v385
    %s387 = sld [smem:[#allocation10 + $0x88]]
    %v388 = vstv %s387
    %v389 = vmul.f32 %v287, %v388
    %v390 = vadd.f32 %v386, %v389
    %s391 = sld [smem:[#allocation10 + $0x89]]
    %v392 = vstv %s391
    %v393 = vmul.f32 %v307, %v392
    %v394 = vadd.f32 %v390, %v393
    %s395 = sld [smem:[#allocation11 + $0x1]]
    %v396 = vstv %s395
    %v397 = vadd.f32 %v394, %v396
    %v398 = vxor.u32 %v397, 2147483648
    %v399 = vmul.f32 %v398, 1.442695
    %v400 = vpow.pop %v399
    %v401 = vadd.f32 %v400, 1.0
    %v402 = vrcp.pop %v401
    %v403 = vmul.f32 1.0, %v402
    %s404 = sld [smem:[#allocation10 + $0x100]]
    %v405 = vstv %s404
    %v406 = vmul.f32 %v127, %v405
    %s407 = sld [smem:[#allocation10 + $0x101]]
    %v408 = vstv %s407
    %v409 = vmul.f32 %v147, %v408
    %v410 = vadd.f32 %v406, %v409
    %s411 = sld [smem:[#allocation10 + $0x102]]
    %v412 = vstv %s411
    %v413 = vmul.f32 %v167, %v412
    %v414 = vadd.f32 %v410, %v413
    %s415 = sld [smem:[#allocation10 + $0x103]]
    %v416 = vstv %s415
    %v417 = vmul.f32 %v187, %v416
    %v418 = vadd.f32 %v414, %v417
    %s419 = sld [smem:[#allocation10 + $0x104]]
    %v420 = vstv %s419
    %v421 = vmul.f32 %v207, %v420
    %v422 = vadd.f32 %v418, %v421
    %s423 = sld [smem:[#allocation10 + $0x105]]
    %v424 = vstv %s423
    %v425 = vmul.f32 %v227, %v424
    %v426 = vadd.f32 %v422, %v425
    %s427 = sld [smem:[#allocation10 + $0x106]]
    %v428 = vstv %s427
    %v429 = vmul.f32 %v247, %v428
    %v430 = vadd.f32 %v426, %v429
    %s431 = sld [smem:[#allocation10 + $0x107]]
    %v432 = vstv %s431
    %v433 = vmul.f32 %v267, %v432
    %v434 = vadd.f32 %v430, %v433
    %s435 = sld [smem:[#allocation10 + $0x108]]
    %v436 = vstv %s435
    %v437 = vmul.f32 %v287, %v436
    %v438 = vadd.f32 %v434, %v437
    %s439 = sld [smem:[#allocation10 + $0x109]]
    %v440 = vstv %s439
    %v441 = vmul.f32 %v307, %v440
    %v442 = vadd.f32 %v438, %v441
    %s443 = sld [smem:[#allocation11 + $0x2]]
    %v444 = vstv %s443
    %v445 = vadd.f32 %v442, %v444
    %v446 = vxor.u32 %v445, 2147483648
    %v447 = vmul.f32 %v446, 1.442695
    %v448 = vpow.pop %v447
    %v449 = vadd.f32 %v448, 1.0
    %v450 = vrcp.pop %v449
    %v451 = vmul.f32 1.0, %v450
    %s452 = sld [smem:[#allocation10 + $0x180]]
    %v453 = vstv %s452
    %v454 = vmul.f32 %v127, %v453
    %s455 = sld [smem:[#allocation10 + $0x181]]
    %v456 = vstv %s455
    %v457 = vmul.f32 %v147, %v456
    %v458 = vadd.f32 %v454, %v457
    %s459 = sld [smem:[#allocation10 + $0x182]]
    %v460 = vstv %s459
    %v461 = vmul.f32 %v167, %v460
    %v462 = vadd.f32 %v458, %v461
    %s463 = sld [smem:[#allocation10 + $0x183]]
    %v464 = vstv %s463
    %v465 = vmul.f32 %v187, %v464
    %v466 = vadd.f32 %v462, %v465
    %s467 = sld [smem:[#allocation10 + $0x184]]
    %v468 = vstv %s467
    %v469 = vmul.f32 %v207, %v468
    %v470 = vadd.f32 %v466, %v469
    %s471 = sld [smem:[#allocation10 + $0x185]]
    %v472 = vstv %s471
    %v473 = vmul.f32 %v227, %v472
    %v474 = vadd.f32 %v470, %v473
    %s475 = sld [smem:[#allocation10 + $0x186]]
    %v476 = vstv %s475
    %v477 = vmul.f32 %v247, %v476
    %v478 = vadd.f32 %v474, %v477
    %s479 = sld [smem:[#allocation10 + $0x187]]
    %v480 = vstv %s479
    %v481 = vmul.f32 %v267, %v480
    %v482 = vadd.f32 %v478, %v481
    %s483 = sld [smem:[#allocation10 + $0x188]]
    %v484 = vstv %s483
    %v485 = vmul.f32 %v287, %v484
    %v486 = vadd.f32 %v482, %v485
    %s487 = sld [smem:[#allocation10 + $0x189]]
    %v488 = vstv %s487
    %v489 = vmul.f32 %v307, %v488
    %v490 = vadd.f32 %v486, %v489
    %s491 = sld [smem:[#allocation11 + $0x3]]
    %v492 = vstv %s491
    %v493 = vadd.f32 %v490, %v492
    %v494 = vxor.u32 %v493, 2147483648
    %v495 = vmul.f32 %v494, 1.442695
    %v496 = vpow.pop %v495
    %v497 = vadd.f32 %v496, 1.0
    %v498 = vrcp.pop %v497
    %v499 = vmul.f32 1.0, %v498
    %s500 = sld [smem:[#allocation10 + $0x200]]
    %v501 = vstv %s500
    %v502 = vmul.f32 %v127, %v501
    %s503 = sld [smem:[#allocation10 + $0x201]]
    %v504 = vstv %s503
    %v505 = vmul.f32 %v147, %v504
    %v506 = vadd.f32 %v502, %v505
    %s507 = sld [smem:[#allocation10 + $0x202]]
    %v508 = vstv %s507
    %v509 = vmul.f32 %v167, %v508
    %v510 = vadd.f32 %v506, %v509
    %s511 = sld [smem:[#allocation10 + $0x203]]
    %v512 = vstv %s511
    %v513 = vmul.f32 %v187, %v512
    %v514 = vadd.f32 %v510, %v513
    %s515 = sld [smem:[#allocation10 + $0x204]]
    %v516 = vstv %s515
    %v517 = vmul.f32 %v207, %v516
    %v518 = vadd.f32 %v514, %v517
    %s519 = sld [smem:[#allocation10 + $0x205]]
    %v520 = vstv %s519
    %v521 = vmul.f32 %v227, %v520
    %v522 = vadd.f32 %v518, %v521
    %s523 = sld [smem:[#allocation10 + $0x206]]
    %v524 = vstv %s523
    %v525 = vmul.f32 %v247, %v524
    %v526 = vadd.f32 %v522, %v525
    %s527 = sld [smem:[#allocation10 + $0x207]]
    %v528 = vstv %s527
    %v529 = vmul.f32 %v267, %v528
    %v530 = vadd.f32 %v526, %v529
    %s531 = sld [smem:[#allocation10 + $0x208]]
    %v532 = vstv %s531
    %v533 = vmul.f32 %v287, %v532
    %v534 = vadd.f32 %v530, %v533
    %s535 = sld [smem:[#allocation10 + $0x209]]
    %v536 = vstv %s535
    %v537 = vmul.f32 %v307, %v536
    %v538 = vadd.f32 %v534, %v537
    %s539 = sld [smem:[#allocation11 + $0x4]]
    %v540 = vstv %s539
    %v541 = vadd.f32 %v538, %v540
    %v542 = vxor.u32 %v541, 2147483648
    %v543 = vmul.f32 %v542, 1.442695
    %v544 = vpow.pop %v543
    %v545 = vadd.f32 %v544, 1.0
    %v546 = vrcp.pop %v545
    %v547 = vmul.f32 1.0, %v546
    %s548 = sld [smem:[#allocation10 + $0x280]]
    %v549 = vstv %s548
    %v550 = vmul.f32 %v127, %v549
    %s551 = sld [smem:[#allocation10 + $0x281]]
    %v552 = vstv %s551
    %v553 = vmul.f32 %v147, %v552
    %v554 = vadd.f32 %v550, %v553
    %s555 = sld [smem:[#allocation10 + $0x282]]
    %v556 = vstv %s555
    %v557 = vmul.f32 %v167, %v556
    %v558 = vadd.f32 %v554, %v557
    %s559 = sld [smem:[#allocation10 + $0x283]]
    %v560 = vstv %s559
    %v561 = vmul.f32 %v187, %v560
    %v562 = vadd.f32 %v558, %v561
    %s563 = sld [smem:[#allocation10 + $0x284]]
    %v564 = vstv %s563
    %v565 = vmul.f32 %v207, %v564
    %v566 = vadd.f32 %v562, %v565
    %s567 = sld [smem:[#allocation10 + $0x285]]
    %v568 = vstv %s567
    %v569 = vmul.f32 %v227, %v568
    %v570 = vadd.f32 %v566, %v569
    %s571 = sld [smem:[#allocation10 + $0x286]]
    %v572 = vstv %s571
    %v573 = vmul.f32 %v247, %v572
    %v574 = vadd.f32 %v570, %v573
    %s575 = sld [smem:[#allocation10 + $0x287]]
    %v576 = vstv %s575
    %v577 = vmul.f32 %v267, %v576
    %v578 = vadd.f32 %v574, %v577
    %s579 = sld [smem:[#allocation10 + $0x288]]
    %v580 = vstv %s579
    %v581 = vmul.f32 %v287, %v580
    %v582 = vadd.f32 %v578, %v581
    %s583 = sld [smem:[#allocation10 + $0x289]]
    %v584 = vstv %s583
    %v585 = vmul.f32 %v307, %v584
    %v586 = vadd.f32 %v582, %v585
    %s587 = sld [smem:[#allocation11 + $0x5]]
    %v588 = vstv %s587
    %v589 = vadd.f32 %v586, %v588
    %v590 = vxor.u32 %v589, 2147483648
    %v591 = vmul.f32 %v590, 1.442695
    %v592 = vpow.pop %v591
    %v593 = vadd.f32 %v592, 1.0
    %v594 = vrcp.pop %v593
    %v595 = vmul.f32 1.0, %v594
    %s596 = sld [smem:[#allocation10 + $0x300]]
    %v597 = vstv %s596
    %v598 = vmul.f32 %v127, %v597
    %s599 = sld [smem:[#allocation10 + $0x301]]
    %v600 = vstv %s599
    %v601 = vmul.f32 %v147, %v600
    %v602 = vadd.f32 %v598, %v601
    %s603 = sld [smem:[#allocation10 + $0x302]]
    %v604 = vstv %s603
    %v605 = vmul.f32 %v167, %v604
    %v606 = vadd.f32 %v602, %v605
    %s607 = sld [smem:[#allocation10 + $0x303]]
    %v608 = vstv %s607
    %v609 = vmul.f32 %v187, %v608
    %v610 = vadd.f32 %v606, %v609
    %s611 = sld [smem:[#allocation10 + $0x304]]
    %v612 = vstv %s611
    %v613 = vmul.f32 %v207, %v612
    %v614 = vadd.f32 %v610, %v613
    %s615 = sld [smem:[#allocation10 + $0x305]]
    %v616 = vstv %s615
    %v617 = vmul.f32 %v227, %v616
    %v618 = vadd.f32 %v614, %v617
    %s619 = sld [smem:[#allocation10 + $0x306]]
    %v620 = vstv %s619
    %v621 = vmul.f32 %v247, %v620
    %v622 = vadd.f32 %v618, %v621
    %s623 = sld [smem:[#allocation10 + $0x307]]
    %v624 = vstv %s623
    %v625 = vmul.f32 %v267, %v624
    %v626 = vadd.f32 %v622, %v625
    %s627 = sld [smem:[#allocation10 + $0x308]]
    %v628 = vstv %s627
    %v629 = vmul.f32 %v287, %v628
    %v630 = vadd.f32 %v626, %v629
    %s631 = sld [smem:[#allocation10 + $0x309]]
    %v632 = vstv %s631
    %v633 = vmul.f32 %v307, %v632
    %v634 = vadd.f32 %v630, %v633
    %s635 = sld [smem:[#allocation11 + $0x6]]
    %v636 = vstv %s635
    %v637 = vadd.f32 %v634, %v636
    %v638 = vxor.u32 %v637, 2147483648
    %v639 = vmul.f32 %v638, 1.442695
    %v640 = vpow.pop %v639
    %v641 = vadd.f32 %v640, 1.0
    %v642 = vrcp.pop %v641
    %v643 = vmul.f32 1.0, %v642
    %s644 = sld [smem:[#allocation10 + $0x380]]
    %v645 = vstv %s644
    %v646 = vmul.f32 %v127, %v645
    %s647 = sld [smem:[#allocation10 + $0x381]]
    %v648 = vstv %s647
    %v649 = vmul.f32 %v147, %v648
    %v650 = vadd.f32 %v646, %v649
    %s651 = sld [smem:[#allocation10 + $0x382]]
    %v652 = vstv %s651
    %v653 = vmul.f32 %v167, %v652
    %v654 = vadd.f32 %v650, %v653
    %s655 = sld [smem:[#allocation10 + $0x383]]
    %v656 = vstv %s655
    %v657 = vmul.f32 %v187, %v656
    %v658 = vadd.f32 %v654, %v657
    %s659 = sld [smem:[#allocation10 + $0x384]]
    %v660 = vstv %s659
    %v661 = vmul.f32 %v207, %v660
    %v662 = vadd.f32 %v658, %v661
    %s663 = sld [smem:[#allocation10 + $0x385]]
    %v664 = vstv %s663
    %v665 = vmul.f32 %v227, %v664
    %v666 = vadd.f32 %v662, %v665
    %s667 = sld [smem:[#allocation10 + $0x386]]
    %v668 = vstv %s667
    %v669 = vmul.f32 %v247, %v668
    %v670 = vadd.f32 %v666, %v669
    %s671 = sld [smem:[#allocation10 + $0x387]]
    %v672 = vstv %s671
    %v673 = vmul.f32 %v267, %v672
    %v674 = vadd.f32 %v670, %v673
    %s675 = sld [smem:[#allocation10 + $0x388]]
    %v676 = vstv %s675
    %v677 = vmul.f32 %v287, %v676
    %v678 = vadd.f32 %v674, %v677
    %s679 = sld [smem:[#allocation10 + $0x389]]
    %v680 = vstv %s679
    %v681 = vmul.f32 %v307, %v680
    %v682 = vadd.f32 %v678, %v681
    %s683 = sld [smem:[#allocation11 + $0x7]]
    %v684 = vstv %s683
    %v685 = vadd.f32 %v682, %v684
    %v686 = vxor.u32 %v685, 2147483648
    %v687 = vmul.f32 %v686, 1.442695
    %v688 = vpow.pop %v687
    %v689 = vadd.f32 %v688, 1.0
    %v690 = vrcp.pop %v689
    %v691 = vmul.f32 1.0, %v690
    %s692 = sld [smem:[#allocation13]]
    %v693 = vstv %s692
    %v694 = vmul.f32 %v355, %v693
    %s695 = sld [smem:[#allocation13 + $0x1]]
    %v696 = vstv %s695
    %v697 = vmul.f32 %v403, %v696
    %v698 = vadd.f32 %v694, %v697
    %s699 = sld [smem:[#allocation13 + $0x2]]
    %v700 = vstv %s699
    %v701 = vmul.f32 %v451, %v700
    %v702 = vadd.f32 %v698, %v701
    %s703 = sld [smem:[#allocation13 + $0x3]]
    %v704 = vstv %s703
    %v705 = vmul.f32 %v499, %v704
    %v706 = vadd.f32 %v702, %v705
    %s707 = sld [smem:[#allocation13 + $0x4]]
    %v708 = vstv %s707
    %v709 = vmul.f32 %v547, %v708
    %v710 = vadd.f32 %v706, %v709
    %s711 = sld [smem:[#allocation13 + $0x5]]
    %v712 = vstv %s711
    %v713 = vmul.f32 %v595, %v712
    %v714 = vadd.f32 %v710, %v713
    %s715 = sld [smem:[#allocation13 + $0x6]]
    %v716 = vstv %s715
    %v717 = vmul.f32 %v643, %v716
    %v718 = vadd.f32 %v714, %v717
    %s719 = sld [smem:[#allocation13 + $0x7]]
    %v720 = vstv %s719
    %v721 = vmul.f32 %v691, %v720
    %v722 = vadd.f32 %v718, %v721
    %s723 = sld [smem:[#allocation2]]
    %v724 = vstv %s723
    %v725 = vadd.f32 %v722, %v724
    %726 = vst [vmem:[#allocation14] sm:$0xff] %v725
    // Predicated region
    $region54: #{tpu_custom_call.1} parent=1 // pred_check
      _
    $region55: #{tpu_custom_call.1} parent=1 // pred_check_branch
      %728 = sbr.rel (0) target = $region57
    $region56: #{tpu_custom_call.1} parent=1 // pred_region
      %s730 = ssub.s32 128, 128
      %731 = vsyncadd [#allocation5], %s730
      %s733 = sshll.u32 [#allocation14], 4
      %s734 = int_to_ptr.vmem [resolvable:$true] %s733
      %736 = dma.vmem_to_hbm [thread:$0]  %s734, 128, %s7, [#allocation5]
    $region57: #{tpu_custom_call.1} parent=1 // pred_fallthru
      _
    // Predicated region
    $region58: #{tpu_custom_call.1} parent=1 // pred_check
      _
    $region59: #{tpu_custom_call.1} parent=1 // pred_check_branch
      %738 = sbr.rel (0) target = $region61
    $region60: #{tpu_custom_call.1} parent=1 // pred_region
      %739 = dma.done [#allocation5], 128
    $region61: #{tpu_custom_call.1} parent=1 // pred_fallthru
      _
    %740 = vsyncpa [#allocation4], 1
    %741 = vsyncpa [#allocation5], 1
    %742 = vsyncpa [#allocation6], 1
    %743 = vsyncpa [#allocation9], 1
    %744 = vsyncpa [#allocation12], 1

</llo_original>
